<compile_context>
chip_gen: v7x
topology: tpu7x:2x2x1
jax: 0.10.0
libtpu: 0.0.40
codegen_flags: <defaults>
</compile_context>

<pallas_src>
import math
import functools

import jax
import jax.numpy as jnp
import numpy as np
from jax import lax
from jax.experimental import pallas as pl
from jax.experimental.pallas import tpu as pltpu


def _round_up(x: int, m: int) -> int:
    return ((x + m - 1) // m) * m


@functools.lru_cache(maxsize=None)
def _roll_config(L: int):
    """Probe pltpu.roll's strided lane rotation for size-L rows.

    We need rolled[t, j] = M[t, (j + t) % L] (each circulant diagonal of M
    lands in one column).  The probe runs on the exact op/shape/dtype used in
    the kernel (an (L, L) f32 tile), so the detected behaviour carries over.

    Returns:
      ("roll", stride) : pltpu.roll(M, 0, axis=1, stride=stride, stride_axis=0)
                         gives the wanted rotation; no flips anywhere.
      ("flip", 1)      : only the opposite rotation lowers; the wrapper flips
                         q along time and tau = L-1-lane.
      ("none", 0)      : strided roll unavailable; roll-free fallback over M.
    """
    x = np.arange(L * L, dtype=np.float32).reshape(L, L) + 1.0
    want_bwd = np.stack([np.roll(x[i], -i) for i in range(L)])
    want_fwd = np.stack([np.roll(x[i], i) for i in range(L)])

    fwd_with_stride1 = False
    for stride in (1, (L - 1) % L):
        if stride == 0:
            continue

        def probe(x_ref, o_ref, _s=stride):
            o_ref[...] = pltpu.roll(x_ref[...], shift=0, axis=1,
                                    stride=_s, stride_axis=0)

        try:
            out = np.asarray(
                pl.pallas_call(
                    probe,
                    out_shape=jax.ShapeDtypeStruct((L, L), jnp.float32),
                )(jnp.asarray(x)))
        except Exception:  # lowering not supported for this stride/shape
            continue
        if np.array_equal(out, want_bwd):
            return ("roll", stride)
        if stride == 1 and np.array_equal(out, want_fwd):
            fwd_with_stride1 = True
    if fwd_with_stride1:
        return ("flip", 1)
    return ("none", 0)


def _autocorr_kernel(q_ref, k_ref, v_ref, o_ref, vv_ref, *,
                     L, inv_ce, top_k, block_b, mode, stride):
    lane = lax.broadcasted_iota(jnp.int32, (1, L), 1)
    # Map each lane of the reduced correlation vector to its delay tau.
    if mode == "roll":      # rolled[t, j] = M[t, (j+t)%L]  ->  tau = (L-j)%L
        tau_lane = jnp.where(lane == 0, 0, L - lane)
    elif mode == "flip":    # q time-reversed + fwd roll    ->  tau = L-1-j
        tau_lane = (L - 1) - lane
    else:                   # fallback builds mv already indexed by tau
        tau_lane = lane

    out_is_f32 = jnp.dtype(o_ref.dtype) == jnp.dtype(jnp.float32)

    for bi in range(block_b):
        q = q_ref[bi]          # (L, CEp)
        k = k_ref[bi]          # (L, CEp)
        v = v_ref[bi]          # (L, CDp)

        # Doubled v (f32) so circular gathers become plain dynamic-start
        # slices:  pattern[t] = v[(t + delay) % L] == vv[delay + t].
        vf = v.astype(jnp.float32)
        vv_ref[pl.ds(0, L), :] = vf
        vv_ref[pl.ds(L, L), :] = vf

        # ---- phase 1: period-based dependency discovery --------------------
        # M[t, s] = sum_c q[t, c] * k[s, c]   (single MXU matmul, f32 accum)
        M = lax.dot_general(q, k, (((1,), (1,)), ((), ())),
                            preferred_element_type=jnp.float32)       # (L, L)

        if mode in ("roll", "flip"):
            # Strided roll: row t rotated by (stride*t) lanes -> each circulant
            # diagonal of M (constant tau) lands in a single column; one
            # cross-sublane reduction then yields all taus at once.
            rolled = pltpu.roll(M, shift=0, axis=1,
                                stride=stride, stride_axis=0)
            mv = jnp.sum(rolled, axis=0, keepdims=True) * inv_ce      # (1, L)
        else:
            # Roll-free fallback: O(L^2) masked reduction of M per tau inside
            # a fori_loop (bounded code size; never touches the (L, CE) slabs).
            sub2 = lax.broadcasted_iota(jnp.int32, (L, L), 0)
            lan2 = lax.broadcasted_iota(jnp.int32, (L, L), 1)
            diff = sub2 - lan2
            taumat = jnp.where(diff < 0, diff + L, diff)              # (t-s)%L

            def body(tau, acc):
                s_val = jnp.sum(jnp.where(taumat == tau, M, 0.0)) * inv_ce
                return acc + jnp.where(lane == tau, s_val, 0.0)

            mv = lax.fori_loop(0, L, body, jnp.zeros((1, L), jnp.float32))

        # ---- top-k delays via iterative argmax ------------------------------
        # Ties broken toward the smallest tau (matches a stable argsort).
        work = mv
        ws, ds = [], []
        for _ in range(top_k):
            w = jnp.max(work)
            tie = work == w
            d = jnp.min(jnp.where(tie, tau_lane, jnp.int32(L)))
            ws.append(w)
            ds.append(d)
            work = jnp.where(tie & (tau_lane == d), -jnp.inf, work)

        # softmax over the top-k weights (ws[0] is the global max -> stable)
        exps = [jnp.exp(w - ws[0]) for w in ws]
        denom = exps[0]
        for e in exps[1:]:
            denom = denom + e
        inv_denom = 1.0 / denom

        # ---- phase 2: time-delay aggregation --------------------------------
        # pattern_i[t, :] = v[(t + delay_i) % L, :] via dynamic slice of vv.
        if out_is_f32:
            # Accumulate in place in the output block; normalize once.
            o_ref[bi] = vv_ref[pl.ds(ds[0], L), :] * exps[0]
            for i in range(1, top_k):
                o_ref[bi] = o_ref[bi] + vv_ref[pl.ds(ds[i], L), :] * exps[i]
            o_ref[bi] = o_ref[bi] * inv_denom
        else:
            acc = vv_ref[pl.ds(ds[0], L), :] * exps[0]
            for i in range(1, top_k):
                acc = acc + vv_ref[pl.ds(ds[i], L), :] * exps[i]
            o_ref[bi] = (acc * inv_denom).astype(o_ref.dtype)


def autocorrelation_forward(queries, keys, values, attn_mask=None, *,
                            factor=1, output_attention=False,
                            qk_dtype=None, out_dtype=None, block_b=None):
    """JAX/Pallas equivalent of AutoCorrelation.forward (eval mode).

    queries: (B, L, H, E), keys: (B, S, H, E), values: (B, S, H, D)
    returns (V, None) with V: (B, L, H, D).

    qk_dtype : dtype of the correlation-matmul operands.  Defaults to the
               native input dtype; pass jnp.bfloat16 for f32 inputs to get the
               fast bf16 MXU path (f32 accumulation, <0.5% score error).  Kept
               opt-in because the scores feed a discrete top-k selection.
    out_dtype: output dtype (defaults to values.dtype; torch's `.float()`
               promotion is reproduced with out_dtype=jnp.float32).
    """
    # TODO(synk): training-mode branch (time_delay_agg_training, batch-shared
    # delays) and the output_attention=True corr map are not emitted here.
    del attn_mask  # unused by the reference forward
    B, L, H, E = queries.shape
    _, S, _, D = values.shape
    if L > S:
        values = jnp.concatenate(
            [values, jnp.zeros((B, L - S, H, D), values.dtype)], axis=1)
        keys = jnp.concatenate(
            [keys, jnp.zeros((B, L - S, H, E), keys.dtype)], axis=1)
    else:
        values = values[:, :L]
        keys = keys[:, :L]

    if out_dtype is None:
        out_dtype = values.dtype
    if qk_dtype is None:
        qk_dtype = jnp.promote_types(queries.dtype, keys.dtype)

    CE, CD = H * E, H * D
    top_k = max(1, min(L, int(factor * math.log(L))))
    mode, stride = _roll_config(L)

    q = queries
    if mode == "flip":
        # Fallback only: time-reversed q makes the fwd strided roll usable
        # (tau = L-1 - lane) at the cost of one extra HBM round trip of q.
        q = jnp.flip(q, axis=1)
    q2 = q.reshape(B, L, CE).astype(qk_dtype)
    k2 = keys.reshape(B, L, CE).astype(qk_dtype)
    v2 = values.reshape(B, L, CD)

    # Lane-density padding: keep the fused channel axes multiples of 128 so
    # the output store is unmasked and the MXU tiles are full.
    CEp, CDp = _round_up(CE, 128), _round_up(CD, 128)
    if CEp != CE:
        q2 = jnp.pad(q2, ((0, 0), (0, 0), (0, CEp - CE)))
        k2 = jnp.pad(k2, ((0, 0), (0, 0), (0, CEp - CE)))
    if CDp != CD:
        v2 = jnp.pad(v2, ((0, 0), (0, 0), (0, CDp - CD)))

    itemsize_qk = jnp.dtype(qk_dtype).itemsize
    itemsize_v = jnp.dtype(v2.dtype).itemsize
    itemsize_o = jnp.dtype(out_dtype).itemsize
    per_batch = (2 * L * CEp * itemsize_qk        # q + k blocks
                 + L * CDp * itemsize_v           # v block
                 + L * CDp * itemsize_o)          # output block

    # Multi-batch blocking: amortize per-step overhead for small L while
    # keeping >=2 grid steps so both v7x TensorCores get work.
    if block_b is None:
        block_b = 1
        budget = 8 * 1024 * 1024
        for bt in range(1, min(B, 8) + 1):
            if B % bt:
                continue
            if bt * per_batch > budget:
                break
            if B >= 2 and B // bt < 2:
                break
            block_b = bt
    assert B % block_b == 0
    n_steps = B // block_b

    # VMEM budget: double-buffered blocks + resident scratch, clamped to ~85%
    # of the physical capacity (64 MiB on v7x, 128 MiB on v5e/v6e).
    fixed = 2 * L * CDp * 4 + 2 * L * L * 4       # doubled-v + M/rolled temps
    needed = 2 * block_b * per_batch + fixed + (2 << 20)
    try:
        cap = int(pltpu.get_tpu_info().vmem_capacity_bytes)
    except Exception:
        cap = 64 * 1024 * 1024
    vmem_limit = int(min(max(needed, 16 * 1024 * 1024), int(0.85 * cap)))

    cost = pl.CostEstimate(
        flops=int(2 * B * L * L * CEp + 2 * B * top_k * L * CDp),
        transcendentals=int(B * top_k),
        bytes_accessed=int(q2.size * q2.dtype.itemsize
                           + k2.size * k2.dtype.itemsize
                           + v2.size * v2.dtype.itemsize
                           + B * L * CDp * itemsize_o))

    kernel = functools.partial(
        _autocorr_kernel, L=L, inv_ce=float(1.0 / CE), top_k=top_k,
        block_b=block_b, mode=mode, stride=stride)

    out = pl.pallas_call(
        kernel,
        out_shape=jax.ShapeDtypeStruct((B, L, CDp), out_dtype),
        grid=(n_steps,),
        in_specs=[
            pl.BlockSpec((block_b, L, CEp), lambda b: (b, 0, 0)),
            pl.BlockSpec((block_b, L, CEp), lambda b: (b, 0, 0)),
            pl.BlockSpec((block_b, L, CDp), lambda b: (b, 0, 0)),
        ],
        out_specs=pl.BlockSpec((block_b, L, CDp), lambda b: (b, 0, 0)),
        scratch_shapes=[pltpu.VMEM((2 * L, CDp), jnp.float32)],
        compiler_params=pltpu.CompilerParams(
            dimension_semantics=("parallel",),
            vmem_limit_bytes=vmem_limit),
        cost_estimate=cost,
    )(q2, k2, v2)

    V = out[..., :CD].reshape(B, L, H, D)
    return V, None


def _reference_numpy(queries, keys, values, factor=1):
    """Pure-numpy replica of the PyTorch eval-mode forward (FFT based)."""
    B, L, H, E = queries.shape
    _, S, _, D = values.shape
    queries = queries.astype(np.float64)
    keys = keys.astype(np.float64)
    values = values.astype(np.float64)
    if L > S:
        values = np.concatenate([values, np.zeros((B, L - S, H, D))], axis=1)
        keys = np.concatenate([keys, np.zeros((B, L - S, H, E))], axis=1)
    else:
        values = values[:, :L]
        keys = keys[:, :L]

    q = np.transpose(queries, (0, 2, 3, 1))          # (B, H, E, L)
    k = np.transpose(keys, (0, 2, 3, 1))
    v = np.transpose(values, (0, 2, 3, 1))           # (B, H, D, L)
    qf = np.fft.rfft(q, axis=-1)
    kf = np.fft.rfft(k, axis=-1)
    corr = np.fft.irfft(qf * np.conj(kf), n=L, axis=-1)   # (B, H, E, L)

    top_k = max(1, min(L, int(factor * math.log(L))))
    mean_value = corr.mean(axis=1).mean(axis=1)            # (B, L)
    order = np.argsort(-mean_value, axis=-1, kind="stable")[:, :top_k]
    weights = np.take_along_axis(mean_value, order, axis=-1)
    w = weights - weights.max(axis=-1, keepdims=True)
    tmp_corr = np.exp(w) / np.exp(w).sum(axis=-1, keepdims=True)

    init_index = np.arange(L)
    tmp_values = np.concatenate([v, v], axis=-1)            # (B, H, D, 2L)
    agg = np.zeros_like(v)
    for i in range(top_k):
        delay = order[:, i][:, None, None, None]
        idx = np.broadcast_to(init_index[None, None, None, :] + delay, v.shape)
        pattern = np.take_along_axis(tmp_values, idx, axis=-1)
        agg = agg + pattern * tmp_corr[:, i][:, None, None, None]
    return np.transpose(agg, (0, 3, 1, 2)).astype(np.float32)   # (B, L, H, D)


if __name__ == "__main__":
    # Lane-dense demo shapes: H*E = H*D = 128 lanes, L = 128 sublanes.
    B, L, S, H, E, D = 2, 128, 128, 4, 32, 32
    key = jax.random.PRNGKey(0)
    kq, kk, kv = jax.random.split(key, 3)
    queries = jax.random.normal(kq, (B, L, H, E), dtype=jnp.float32)
    keys = jax.random.normal(kk, (B, S, H, E), dtype=jnp.float32)
    values = jax.random.normal(kv, (B, S, H, D), dtype=jnp.float32)

    # 1) native f32 path (bit-accurate vs. the FFT reference within fp error)
    V, attn = autocorrelation_forward(queries, keys, values, None, factor=1)
    V = jax.block_until_ready(V)
    V_ref = _reference_numpy(np.asarray(queries), np.asarray(keys),
                             np.asarray(values), factor=1)
    np.testing.assert_allclose(np.asarray(V, dtype=np.float32), V_ref,
                               rtol=2e-3, atol=2e-3)

    # 2) fast bf16 MXU path (bf16 in / bf16 out).  The reference sees the same
    #    bf16-rounded inputs so only accumulation precision / output rounding
    #    differ.
    q16 = queries.astype(jnp.bfloat16)
    k16 = keys.astype(jnp.bfloat16)
    v16 = values.astype(jnp.bfloat16)
    V16, _ = autocorrelation_forward(q16, k16, v16, None, factor=1)
    V16 = jax.block_until_ready(V16)
    V16_ref = _reference_numpy(np.asarray(q16.astype(jnp.float32)),
                               np.asarray(k16.astype(jnp.float32)),
                               np.asarray(v16.astype(jnp.float32)), factor=1)
    np.testing.assert_allclose(np.asarray(V16.astype(jnp.float32)), V16_ref,
                               rtol=3e-2, atol=3e-2)

    print("KERNEL_OK")
</pallas_src>

<mosaic_0001>
module attributes {stable_mosaic.version = 11 : i64} {
  func.func @probe(%arg0: memref<128x128xf32, #tpu.memory_space<vmem>>, %arg1: memref<128x128xf32, #tpu.memory_space<vmem>>) attributes {dimension_semantics = [], scalar_prefetch = 0 : i64, scratch_operands = 0 : i64, tpu.core_type = #tpu.core_type<tc>} {
    %c0 = arith.constant 0 : index
    %c0_0 = arith.constant 0 : index
    %0 = vector.load %arg0[%c0, %c0_0] : memref<128x128xf32, #tpu.memory_space<vmem>>, vector<128x128xf32>
    %c0_i32 = arith.constant 0 : i32
    %1 = tpu.dynamic_rotate %0 by %c0_i32 dim 1 {stride = 1 : si32, stride_dimension = 0 : si32} : vector<128x128xf32>, i32 -> vector<128x128xf32>
    %c0_1 = arith.constant 0 : index
    %c0_2 = arith.constant 0 : index
    %2 = vector.load %arg1[%c0_1, %c0_2] : memref<128x128xf32, #tpu.memory_space<vmem>>, vector<128x128xf32>
    tpu.vector_store %arg1[%c0_1, %c0_2], %1 {strides = array<i32>} : memref<128x128xf32, #tpu.memory_space<vmem>>, vector<128x128xf32>,
    return
  }
}

module attributes {stable_mosaic.version = 11 : i64} {
  func.func @probe(%arg0: memref<128x128xf32, #tpu.memory_space<vmem>>, %arg1: memref<128x128xf32, #tpu.memory_space<vmem>>) attributes {dimension_semantics = [], scalar_prefetch = 0 : i64, scratch_operands = 0 : i64, tpu.core_type = #tpu.core_type<tc>} {
    %c0 = arith.constant 0 : index
    %c0_0 = arith.constant 0 : index
    %0 = vector.load %arg0[%c0, %c0_0] : memref<128x128xf32, #tpu.memory_space<vmem>>, vector<128x128xf32>
    %c0_i32 = arith.constant 0 : i32
    %1 = tpu.dynamic_rotate %0 by %c0_i32 dim 1 {stride = 127 : si32, stride_dimension = 0 : si32} : vector<128x128xf32>, i32 -> vector<128x128xf32>
    %c0_1 = arith.constant 0 : index
    %c0_2 = arith.constant 0 : index
    %2 = vector.load %arg1[%c0_1, %c0_2] : memref<128x128xf32, #tpu.memory_space<vmem>>, vector<128x128xf32>
    tpu.vector_store %arg1[%c0_1, %c0_2], %1 {strides = array<i32>} : memref<128x128xf32, #tpu.memory_space<vmem>>, vector<128x128xf32>,
    return
  }
}

module attributes {stable_mosaic.version = 11 : i64} {
  func.func @_autocorr_kernel(%arg0: i32, %arg1: memref<1x128x128xf32, #tpu.memory_space<vmem>>, %arg2: memref<1x128x128xf32, #tpu.memory_space<vmem>>, %arg3: memref<1x128x128xf32, #tpu.memory_space<vmem>>, %arg4: memref<1x128x128xf32, #tpu.memory_space<vmem>>, %arg5: memref<256x128xf32, #tpu.memory_space<vmem>>) attributes {dimension_semantics = [#tpu.dimension_semantics<parallel>], iteration_bounds = array<i64: 2>, scalar_prefetch = 0 : i64, scratch_operands = 1 : i64, tpu.core_type = #tpu.core_type<tc>, window_params = [{transform_indices = @transform_0, window_bounds = array<i64: 1, 128, 128>}, {transform_indices = @transform_1, window_bounds = array<i64: 1, 128, 128>}, {transform_indices = @transform_2, window_bounds = array<i64: 1, 128, 128>}, {transform_indices = @transform_3, window_bounds = array<i64: 1, 128, 128>}]} {
    %0 = tpu.iota {dimensions = array<i32: 1>} : vector<1x128xi32>
    %c0 = arith.constant 0 : index
    %c0_0 = arith.constant 0 : index
    %c0_1 = arith.constant 0 : index
    %1 = vector.load %arg1[%c0, %c0_0, %c0_1] : memref<1x128x128xf32, #tpu.memory_space<vmem>>, vector<1x128x128xf32>
    %2 = vector.shape_cast %1 : vector<1x128x128xf32> to vector<128x128xf32>
    %c0_2 = arith.constant 0 : index
    %c0_3 = arith.constant 0 : index
    %c0_4 = arith.constant 0 : index
    %3 = vector.load %arg2[%c0_2, %c0_3, %c0_4] : memref<1x128x128xf32, #tpu.memory_space<vmem>>, vector<1x128x128xf32>
    %4 = vector.shape_cast %3 : vector<1x128x128xf32> to vector<128x128xf32>
    %c0_5 = arith.constant 0 : index
    %c0_6 = arith.constant 0 : index
    %c0_7 = arith.constant 0 : index
    %5 = vector.load %arg3[%c0_5, %c0_6, %c0_7] : memref<1x128x128xf32, #tpu.memory_space<vmem>>, vector<1x128x128xf32>
    %6 = vector.shape_cast %5 : vector<1x128x128xf32> to vector<128x128xf32>
    %c0_8 = arith.constant 0 : index
    %c0_9 = arith.constant 0 : index
    %7 = vector.load %arg5[%c0_8, %c0_9] : memref<256x128xf32, #tpu.memory_space<vmem>>, vector<128x128xf32>
    tpu.vector_store %arg5[%c0_8, %c0_9], %6 {strides = array<i32>} : memref<256x128xf32, #tpu.memory_space<vmem>>, vector<128x128xf32>,
    %c128 = arith.constant 128 : index
    %c0_10 = arith.constant 0 : index
    %8 = vector.load %arg5[%c128, %c0_10] : memref<256x128xf32, #tpu.memory_space<vmem>>, vector<128x128xf32>
    tpu.vector_store %arg5[%c128, %c0_10], %6 {strides = array<i32>} : memref<256x128xf32, #tpu.memory_space<vmem>>, vector<128x128xf32>,
    %cst = arith.constant dense<0.000000e+00> : vector<128x128xf32>
    %9 = tpu.matmul %2, %4, %cst {dimension_numbers = #tpu.dot_dimension_numbers<[1], [1], [0], [0], [0, 0, 1, 0], [], []>} : vector<128x128xf32>, vector<128x128xf32>, vector<128x128xf32> -> vector<128x128xf32>
    %10 = tpu.iota {dimensions = array<i32: 0>} : vector<128x128xi32>
    %11 = tpu.iota {dimensions = array<i32: 1>} : vector<128x128xi32>
    %12 = arith.subi %10, %11 : vector<128x128xi32>
    %c0_i32 = arith.constant 0 : i32
    %13 = vector.broadcast %c0_i32 : i32 to vector<128x128xi32>
    %14 = arith.cmpi slt, %12, %13 : vector<128x128xi32>
    %c128_i32 = arith.constant 128 : i32
    %15 = vector.broadcast %c128_i32 : i32 to vector<128x128xi32>
    %16 = arith.addi %12, %15 : vector<128x128xi32>
    %17 = arith.select %14, %16, %12 : vector<128x128xi1>, vector<128x128xi32>
    %cst_11 = arith.constant 0.000000e+00 : f32
    %18 = vector.broadcast %cst_11 : f32 to vector<1x128xf32>
    %c0_i32_12 = arith.constant 0 : i32
    %c128_i32_13 = arith.constant 128 : i32
    %19 = arith.addi %c0_i32_12, %c128_i32_13 : i32
    %c1_i32 = arith.constant 1 : i32
    %20 = scf.for %arg6 = %c0_i32_12 to %19 step %c1_i32 iter_args(%arg7 = %18) -> (vector<1x128xf32>)  : i32 {
      %140 = vector.broadcast %arg6 : i32 to vector<128x128xi32>
      %141 = arith.cmpi eq, %17, %140 : vector<128x128xi32>
      %cst_62 = arith.constant 0.000000e+00 : f32
      %142 = vector.broadcast %cst_62 : f32 to vector<128x128xf32>
      %143 = arith.select %141, %9, %142 : vector<128x128xi1>, vector<128x128xf32>
      %144 = vector.shape_cast %143 : vector<128x128xf32> to vector<1x128x128xf32>
      %cst_63 = arith.constant dense<0.000000e+00> : vector<1xf32>
      %145 = vector.multi_reduction <add>, %144, %cst_63 [1, 2] : vector<1x128x128xf32> to vector<1xf32>
      %146 = vector.shape_cast %145 : vector<1xf32> to vector<1x1x1xf32>
      %147 = vector.extract %146[0, 0, 0] : f32 from vector<1x1x1xf32>
      %cst_64 = arith.constant 7.812500e-03 : f32
      %148 = arith.mulf %147, %cst_64 : f32
      %149 = vector.broadcast %arg6 : i32 to vector<1x128xi32>
      %150 = arith.cmpi eq, %0, %149 : vector<1x128xi32>
      %cst_65 = arith.constant 0.000000e+00 : f32
      %151 = vector.broadcast %148 : f32 to vector<1x128xf32>
      %152 = vector.broadcast %cst_65 : f32 to vector<1x128xf32>
      %153 = arith.select %150, %151, %152 : vector<1x128xi1>, vector<1x128xf32>
      %154 = arith.addf %arg7, %153 : vector<1x128xf32>
      scf.yield %154 : vector<1x128xf32>
    }
    %c128_i32_14 = arith.constant 128 : i32
    %21 = vector.shape_cast %20 : vector<1x128xf32> to vector<1x1x128xf32>
    %cst_15 = arith.constant dense<0xFF800000> : vector<1xf32>
    %22 = vector.multi_reduction <maximumf>, %21, %cst_15 [1, 2] : vector<1x1x128xf32> to vector<1xf32>
    %23 = vector.shape_cast %22 : vector<1xf32> to vector<1x1x1xf32>
    %24 = vector.extract %23[0, 0, 0] : f32 from vector<1x1x1xf32>
    %25 = vector.broadcast %24 : f32 to vector<1x128xf32>
    %26 = arith.cmpf oeq, %20, %25 : vector<1x128xf32>
    %c128_i32_16 = arith.constant 128 : i32
    %27 = vector.broadcast %c128_i32_16 : i32 to vector<1x128xi32>
    %28 = arith.select %26, %0, %27 : vector<1x128xi1>, vector<1x128xi32>
    %29 = vector.shape_cast %28 : vector<1x128xi32> to vector<1x1x128xi32>
    %cst_17 = arith.constant dense<2147483647> : vector<1xi32>
    %30 = vector.multi_reduction <minsi>, %29, %cst_17 [1, 2] : vector<1x1x128xi32> to vector<1xi32>
    %31 = vector.shape_cast %30 : vector<1xi32> to vector<1x1x1xi32>
    %32 = vector.extract %31[0, 0, 0] : i32 from vector<1x1x1xi32>
    %33 = vector.broadcast %32 : i32 to vector<1x128xi32>
    %34 = arith.cmpi eq, %0, %33 : vector<1x128xi32>
    %35 = arith.andi %26, %34 : vector<1x128xi1>
    %cst_18 = arith.constant 0xFF800000 : f32
    %36 = vector.broadcast %cst_18 : f32 to vector<1x128xf32>
    %37 = arith.select %35, %36, %20 : vector<1x128xi1>, vector<1x128xf32>
    %38 = vector.shape_cast %37 : vector<1x128xf32> to vector<1x1x128xf32>
    %cst_19 = arith.constant dense<0xFF800000> : vector<1xf32>
    %39 = vector.multi_reduction <maximumf>, %38, %cst_19 [1, 2] : vector<1x1x128xf32> to vector<1xf32>
    %40 = vector.shape_cast %39 : vector<1xf32> to vector<1x1x1xf32>
    %41 = vector.extract %40[0, 0, 0] : f32 from vector<1x1x1xf32>
    %42 = vector.broadcast %41 : f32 to vector<1x128xf32>
    %43 = arith.cmpf oeq, %37, %42 : vector<1x128xf32>
    %c128_i32_20 = arith.constant 128 : i32
    %44 = vector.broadcast %c128_i32_20 : i32 to vector<1x128xi32>
    %45 = arith.select %43, %0, %44 : vector<1x128xi1>, vector<1x128xi32>
    %46 = vector.shape_cast %45 : vector<1x128xi32> to vector<1x1x128xi32>
    %cst_21 = arith.constant dense<2147483647> : vector<1xi32>
    %47 = vector.multi_reduction <minsi>, %46, %cst_21 [1, 2] : vector<1x1x128xi32> to vector<1xi32>
    %48 = vector.shape_cast %47 : vector<1xi32> to vector<1x1x1xi32>
    %49 = vector.extract %48[0, 0, 0] : i32 from vector<1x1x1xi32>
    %50 = vector.broadcast %49 : i32 to vector<1x128xi32>
    %51 = arith.cmpi eq, %0, %50 : vector<1x128xi32>
    %52 = arith.andi %43, %51 : vector<1x128xi1>
    %cst_22 = arith.constant 0xFF800000 : f32
    %53 = vector.broadcast %cst_22 : f32 to vector<1x128xf32>
    %54 = arith.select %52, %53, %37 : vector<1x128xi1>, vector<1x128xf32>
    %55 = vector.shape_cast %54 : vector<1x128xf32> to vector<1x1x128xf32>
    %cst_23 = arith.constant dense<0xFF800000> : vector<1xf32>
    %56 = vector.multi_reduction <maximumf>, %55, %cst_23 [1, 2] : vector<1x1x128xf32> to vector<1xf32>
    %57 = vector.shape_cast %56 : vector<1xf32> to vector<1x1x1xf32>
    %58 = vector.extract %57[0, 0, 0] : f32 from vector<1x1x1xf32>
    %59 = vector.broadcast %58 : f32 to vector<1x128xf32>
    %60 = arith.cmpf oeq, %54, %59 : vector<1x128xf32>
    %c128_i32_24 = arith.constant 128 : i32
    %61 = vector.broadcast %c128_i32_24 : i32 to vector<1x128xi32>
    %62 = arith.select %60, %0, %61 : vector<1x128xi1>, vector<1x128xi32>
    %63 = vector.shape_cast %62 : vector<1x128xi32> to vector<1x1x128xi32>
    %cst_25 = arith.constant dense<2147483647> : vector<1xi32>
    %64 = vector.multi_reduction <minsi>, %63, %cst_25 [1, 2] : vector<1x1x128xi32> to vector<1xi32>
    %65 = vector.shape_cast %64 : vector<1xi32> to vector<1x1x1xi32>
    %66 = vector.extract %65[0, 0, 0] : i32 from vector<1x1x1xi32>
    %67 = vector.broadcast %66 : i32 to vector<1x128xi32>
    %68 = arith.cmpi eq, %0, %67 : vector<1x128xi32>
    %69 = arith.andi %60, %68 : vector<1x128xi1>
    %cst_26 = arith.constant 0xFF800000 : f32
    %70 = vector.broadcast %cst_26 : f32 to vector<1x128xf32>
    %71 = arith.select %69, %70, %54 : vector<1x128xi1>, vector<1x128xf32>
    %72 = vector.shape_cast %71 : vector<1x128xf32> to vector<1x1x128xf32>
    %cst_27 = arith.constant dense<0xFF800000> : vector<1xf32>
    %73 = vector.multi_reduction <maximumf>, %72, %cst_27 [1, 2] : vector<1x1x128xf32> to vector<1xf32>
    %74 = vector.shape_cast %73 : vector<1xf32> to vector<1x1x1xf32>
    %75 = vector.extract %74[0, 0, 0] : f32 from vector<1x1x1xf32>
    %76 = vector.broadcast %75 : f32 to vector<1x128xf32>
    %77 = arith.cmpf oeq, %71, %76 : vector<1x128xf32>
    %c128_i32_28 = arith.constant 128 : i32
    %78 = vector.broadcast %c128_i32_28 : i32 to vector<1x128xi32>
    %79 = arith.select %77, %0, %78 : vector<1x128xi1>, vector<1x128xi32>
    %80 = vector.shape_cast %79 : vector<1x128xi32> to vector<1x1x128xi32>
    %cst_29 = arith.constant dense<2147483647> : vector<1xi32>
    %81 = vector.multi_reduction <minsi>, %80, %cst_29 [1, 2] : vector<1x1x128xi32> to vector<1xi32>
    %82 = vector.shape_cast %81 : vector<1xi32> to vector<1x1x1xi32>
    %83 = vector.extract %82[0, 0, 0] : i32 from vector<1x1x1xi32>
    %84 = arith.subf %24, %24 : f32
    %85 = math.exp %84 : f32
    %86 = arith.subf %41, %24 : f32
    %87 = math.exp %86 : f32
    %88 = arith.subf %58, %24 : f32
    %89 = math.exp %88 : f32
    %90 = arith.subf %75, %24 : f32
    %91 = math.exp %90 : f32
    %92 = arith.addf %85, %87 : f32
    %93 = arith.addf %92, %89 : f32
    %94 = arith.addf %93, %91 : f32
    %cst_30 = arith.constant 1.000000e+00 : f32
    %95 = arith.divf %cst_30, %94 : f32
    %96 = arith.index_cast %32 : i32 to index
    %c0_31 = arith.constant 0 : index
    %97 = vector.load %arg5[%96, %c0_31] : memref<256x128xf32, #tpu.memory_space<vmem>>, vector<128x128xf32>
    %98 = vector.broadcast %85 : f32 to vector<128x128xf32>
    %99 = arith.mulf %97, %98 : vector<128x128xf32>
    %c0_32 = arith.constant 0 : index
    %c0_33 = arith.constant 0 : index
    %c0_34 = arith.constant 0 : index
    %100 = vector.load %arg4[%c0_32, %c0_33, %c0_34] : memref<1x128x128xf32, #tpu.memory_space<vmem>>, vector<1x128x128xf32>
    %101 = vector.shape_cast %100 : vector<1x128x128xf32> to vector<128x128xf32>
    %102 = vector.shape_cast %99 : vector<128x128xf32> to vector<1x128x128xf32>
    tpu.vector_store %arg4[%c0_32, %c0_33, %c0_34], %102 {strides = array<i32>} : memref<1x128x128xf32, #tpu.memory_space<vmem>>, vector<1x128x128xf32>,
    %c0_35 = arith.constant 0 : index
    %c0_36 = arith.constant 0 : index
    %c0_37 = arith.constant 0 : index
    %103 = vector.load %arg4[%c0_35, %c0_36, %c0_37] : memref<1x128x128xf32, #tpu.memory_space<vmem>>, vector<1x128x128xf32>
    %104 = vector.shape_cast %103 : vector<1x128x128xf32> to vector<128x128xf32>
    %105 = arith.index_cast %49 : i32 to index
    %c0_38 = arith.constant 0 : index
    %106 = vector.load %arg5[%105, %c0_38] : memref<256x128xf32, #tpu.memory_space<vmem>>, vector<128x128xf32>
    %107 = vector.broadcast %87 : f32 to vector<128x128xf32>
    %108 = arith.mulf %106, %107 : vector<128x128xf32>
    %109 = arith.addf %104, %108 : vector<128x128xf32>
    %c0_39 = arith.constant 0 : index
    %c0_40 = arith.constant 0 : index
    %c0_41 = arith.constant 0 : index
    %110 = vector.load %arg4[%c0_39, %c0_40, %c0_41] : memref<1x128x128xf32, #tpu.memory_space<vmem>>, vector<1x128x128xf32>
    %111 = vector.shape_cast %110 : vector<1x128x128xf32> to vector<128x128xf32>
    %112 = vector.shape_cast %109 : vector<128x128xf32> to vector<1x128x128xf32>
    tpu.vector_store %arg4[%c0_39, %c0_40, %c0_41], %112 {strides = array<i32>} : memref<1x128x128xf32, #tpu.memory_space<vmem>>, vector<1x128x128xf32>,
    %c0_42 = arith.constant 0 : index
    %c0_43 = arith.constant 0 : index
    %c0_44 = arith.constant 0 : index
    %113 = vector.load %arg4[%c0_42, %c0_43, %c0_44] : memref<1x128x128xf32, #tpu.memory_space<vmem>>, vector<1x128x128xf32>
    %114 = vector.shape_cast %113 : vector<1x128x128xf32> to vector<128x128xf32>
    %115 = arith.index_cast %66 : i32 to index
    %c0_45 = arith.constant 0 : index
    %116 = vector.load %arg5[%115, %c0_45] : memref<256x128xf32, #tpu.memory_space<vmem>>, vector<128x128xf32>
    %117 = vector.broadcast %89 : f32 to vector<128x128xf32>
    %118 = arith.mulf %116, %117 : vector<128x128xf32>
    %119 = arith.addf %114, %118 : vector<128x128xf32>
    %c0_46 = arith.constant 0 : index
    %c0_47 = arith.constant 0 : index
    %c0_48 = arith.constant 0 : index
    %120 = vector.load %arg4[%c0_46, %c0_47, %c0_48] : memref<1x128x128xf32, #tpu.memory_space<vmem>>, vector<1x128x128xf32>
    %121 = vector.shape_cast %120 : vector<1x128x128xf32> to vector<128x128xf32>
    %122 = vector.shape_cast %119 : vector<128x128xf32> to vector<1x128x128xf32>
    tpu.vector_store %arg4[%c0_46, %c0_47, %c0_48], %122 {strides = array<i32>} : memref<1x128x128xf32, #tpu.memory_space<vmem>>, vector<1x128x128xf32>,
    %c0_49 = arith.constant 0 : index
    %c0_50 = arith.constant 0 : index
    %c0_51 = arith.constant 0 : index
    %123 = vector.load %arg4[%c0_49, %c0_50, %c0_51] : memref<1x128x128xf32, #tpu.memory_space<vmem>>, vector<1x128x128xf32>
    %124 = vector.shape_cast %123 : vector<1x128x128xf32> to vector<128x128xf32>
    %125 = arith.index_cast %83 : i32 to index
    %c0_52 = arith.constant 0 : index
    %126 = vector.load %arg5[%125, %c0_52] : memref<256x128xf32, #tpu.memory_space<vmem>>, vector<128x128xf32>
    %127 = vector.broadcast %91 : f32 to vector<128x128xf32>
    %128 = arith.mulf %126, %127 : vector<128x128xf32>
    %129 = arith.addf %124, %128 : vector<128x128xf32>
    %c0_53 = arith.constant 0 : index
    %c0_54 = arith.constant 0 : index
    %c0_55 = arith.constant 0 : index
    %130 = vector.load %arg4[%c0_53, %c0_54, %c0_55] : memref<1x128x128xf32, #tpu.memory_space<vmem>>, vector<1x128x128xf32>
    %131 = vector.shape_cast %130 : vector<1x128x128xf32> to vector<128x128xf32>
    %132 = vector.shape_cast %129 : vector<128x128xf32> to vector<1x128x128xf32>
    tpu.vector_store %arg4[%c0_53, %c0_54, %c0_55], %132 {strides = array<i32>} : memref<1x128x128xf32, #tpu.memory_space<vmem>>, vector<1x128x128xf32>,
    %c0_56 = arith.constant 0 : index
    %c0_57 = arith.constant 0 : index
    %c0_58 = arith.constant 0 : index
    %133 = vector.load %arg4[%c0_56, %c0_57, %c0_58] : memref<1x128x128xf32, #tpu.memory_space<vmem>>, vector<1x128x128xf32>
    %134 = vector.shape_cast %133 : vector<1x128x128xf32> to vector<128x128xf32>
    %135 = vector.broadcast %95 : f32 to vector<128x128xf32>
    %136 = arith.mulf %134, %135 : vector<128x128xf32>
    %c0_59 = arith.constant 0 : index
    %c0_60 = arith.constant 0 : index
    %c0_61 = arith.constant 0 : index
    %137 = vector.load %arg4[%c0_59, %c0_60, %c0_61] : memref<1x128x128xf32, #tpu.memory_space<vmem>>, vector<1x128x128xf32>
    %138 = vector.shape_cast %137 : vector<1x128x128xf32> to vector<128x128xf32>
    %139 = vector.shape_cast %136 : vector<128x128xf32> to vector<1x128x128xf32>
    tpu.vector_store %arg4[%c0_59, %c0_60, %c0_61], %139 {strides = array<i32>} : memref<1x128x128xf32, #tpu.memory_space<vmem>>, vector<1x128x128xf32>,
    return
  }
  func.func @transform_0(%arg0: i32) -> (i32, i32, i32) {
    %c0_i32 = arith.constant 0 : i32
    %c0_i32_0 = arith.constant 0 : i32
    %c0_i32_1 = arith.constant 0 : i32
    return %arg0, %c0_i32, %c0_i32_0 : i32, i32, i32
  }
  func.func @transform_1(%arg0: i32) -> (i32, i32, i32) {
    %c0_i32 = arith.constant 0 : i32
    %c0_i32_0 = arith.constant 0 : i32
    %c0_i32_1 = arith.constant 0 : i32
    return %arg0, %c0_i32, %c0_i32_0 : i32, i32, i32
  }
  func.func @transform_2(%arg0: i32) -> (i32, i32, i32) {
    %c0_i32 = arith.constant 0 : i32
    %c0_i32_0 = arith.constant 0 : i32
    %c0_i32_1 = arith.constant 0 : i32
    return %arg0, %c0_i32, %c0_i32_0 : i32, i32, i32
  }
  func.func @transform_3(%arg0: i32) -> (i32, i32, i32) {
    %c0_i32 = arith.constant 0 : i32
    %c0_i32_0 = arith.constant 0 : i32
    %c0_i32_1 = arith.constant 0 : i32
    return %arg0, %c0_i32, %c0_i32_0 : i32, i32, i32
  }
}

</mosaic_0001>

<llo_original>
// kernel: tpu_custom_call.1
$region0: #{tpu_custom_call.1}
  #allocation0 [shape = 'u32[]', space=smem, size = 0x4, offset = 0x4, fixed_abs, tag = 'smem constant byte address 0x4 - core index']
  #allocation1 [shape = 'u32[144,128]{1,0:T(1,128)}', space=vmem, size = 0x12000, scoped, tag = 'internal scratch']
  %s0 = inlined_call_operand.hbm [shape: f32[128,128], index: 0, kind: input, shape index: {}]
  %s1 = inlined_call_operand.hbm [shape: f32[128,128], index: 1, kind: output, shape index: {}]
  %s2 = sld [smem:[#allocation0]]
  $region18: #{tpu_custom_call.1} parent=0
    _
  %s4 = ssub.s32 1, %s2
  %s5 = scalar_select 0, %s4, %s2
  $region1: #{tpu_custom_call.1} parent=0
    #allocation2 [shape = 'u8[65536]{0}', space=vmem, size = 0x10000, scoped, tag = 'input window, operand 0, single buffered']
    #allocation3 [shape = 's32[1]{0}', space=sflag, size = 0x4, scoped, tag = 'scoped memory for tpu_custom_call.1']
    #allocation4 [shape = 's32[1]{0}', space=sflag, size = 0x4, scoped, tag = 'scoped memory for tpu_custom_call.1']
    #allocation5 [shape = 'u8[65536]{0}', space=vmem, size = 0x10000, scoped, tag = 'output window, operand 0, single buffered']
    %6 = vsyncpa [#allocation3], 0
    %7 = vsyncpa [#allocation4], 0
    // Predicated region
    $region2: #{tpu_custom_call.1} parent=1 // pred_check
      _
    $region3: #{tpu_custom_call.1} parent=1 // pred_check_branch
      %9 = sbr.rel (0) target = $region5
    $region4: #{tpu_custom_call.1} parent=1 // pred_region
      %s11 = ssub.s32 2048, 2048
      %12 = vsyncadd [#allocation3], %s11
      %s13 = sshll.u32 [#allocation2], 4
      %s14 = int_to_ptr.vmem [resolvable:$true] %s13
      %19 = dma.hbm_to_vmem [thread:$0]  %s0, 2048, %s14, [#allocation3], 128, 128, 8
    $region5: #{tpu_custom_call.1} parent=1 // pred_fallthru
      _
    // Predicated region
    $region6: #{tpu_custom_call.1} parent=1 // pred_check
      _
    $region7: #{tpu_custom_call.1} parent=1 // pred_check_branch
      %21 = sbr.rel (0) target = $region9
    $region8: #{tpu_custom_call.1} parent=1 // pred_region
      %22 = dma.done [#allocation3], 2048
    $region9: #{tpu_custom_call.1} parent=1 // pred_fallthru
      _
    %v23 = vld [vmem:[#allocation2] sm:$0xff]
    %v24 = vld [vmem:[#allocation2 + $0x8] sm:$0xff]
    %v25 = vld [vmem:[#allocation2 + $0x10] sm:$0xff]
    %v26 = vld [vmem:[#allocation2 + $0x18] sm:$0xff]
    %v27 = vld [vmem:[#allocation2 + $0x20] sm:$0xff]
    %v28 = vld [vmem:[#allocation2 + $0x28] sm:$0xff]
    %v29 = vld [vmem:[#allocation2 + $0x30] sm:$0xff]
    %v30 = vld [vmem:[#allocation2 + $0x38] sm:$0xff]
    %v31 = vld [vmem:[#allocation2 + $0x40] sm:$0xff]
    %v32 = vld [vmem:[#allocation2 + $0x48] sm:$0xff]
    %v33 = vld [vmem:[#allocation2 + $0x50] sm:$0xff]
    %v34 = vld [vmem:[#allocation2 + $0x58] sm:$0xff]
    %v35 = vld [vmem:[#allocation2 + $0x60] sm:$0xff]
    %v36 = vld [vmem:[#allocation2 + $0x68] sm:$0xff]
    %v37 = vld [vmem:[#allocation2 + $0x70] sm:$0xff]
    %v38 = vld [vmem:[#allocation2 + $0x78] sm:$0xff]
    %40 = vrot.lane.b32.xlu0 %v23, 256
    %v41 = vpop.permute.xlu0 %40
    %s43 = sor.u32 256, 8
    %44 = vrot.lane.b32.xlu0 %v24, %s43
    %v45 = vpop.permute.xlu0 %44
    %s47 = sor.u32 256, 16
    %48 = vrot.lane.b32.xlu0 %v25, %s47
    %v49 = vpop.permute.xlu0 %48
    %s51 = sor.u32 256, 24
    %52 = vrot.lane.b32.xlu0 %v26, %s51
    %v53 = vpop.permute.xlu0 %52
    %s55 = sor.u32 256, 32
    %56 = vrot.lane.b32.xlu0 %v27, %s55
    %v57 = vpop.permute.xlu0 %56
    %s59 = sor.u32 256, 40
    %60 = vrot.lane.b32.xlu0 %v28, %s59
    %v61 = vpop.permute.xlu0 %60
    %s63 = sor.u32 256, 48
    %64 = vrot.lane.b32.xlu0 %v29, %s63
    %v65 = vpop.permute.xlu0 %64
    %s67 = sor.u32 256, 56
    %68 = vrot.lane.b32.xlu0 %v30, %s67
    %v69 = vpop.permute.xlu0 %68
    %s71 = sor.u32 256, 64
    %72 = vrot.lane.b32.xlu0 %v31, %s71
    %v73 = vpop.permute.xlu0 %72
    %s75 = sor.u32 256, 72
    %76 = vrot.lane.b32.xlu0 %v32, %s75
    %v77 = vpop.permute.xlu0 %76
    %s79 = sor.u32 256, 80
    %80 = vrot.lane.b32.xlu0 %v33, %s79
    %v81 = vpop.permute.xlu0 %80
    %s83 = sor.u32 256, 88
    %84 = vrot.lane.b32.xlu0 %v34, %s83
    %v85 = vpop.permute.xlu0 %84
    %s87 = sor.u32 256, 96
    %88 = vrot.lane.b32.xlu0 %v35, %s87
    %v89 = vpop.permute.xlu0 %88
    %s91 = sor.u32 256, 104
    %92 = vrot.lane.b32.xlu0 %v36, %s91
    %v93 = vpop.permute.xlu0 %92
    %s95 = sor.u32 256, 112
    %96 = vrot.lane.b32.xlu0 %v37, %s95
    %v97 = vpop.permute.xlu0 %96
    %s99 = sor.u32 256, 120
    %100 = vrot.lane.b32.xlu0 %v38, %s99
    %v101 = vpop.permute.xlu0 %100
    %102 = vst [vmem:[#allocation5] sm:$0xff] %v41
    %103 = vst [vmem:[#allocation5 + $0x8] sm:$0xff] %v45
    %104 = vst [vmem:[#allocation5 + $0x10] sm:$0xff] %v49
    %105 = vst [vmem:[#allocation5 + $0x18] sm:$0xff] %v53
    %106 = vst [vmem:[#allocation5 + $0x20] sm:$0xff] %v57
    %107 = vst [vmem:[#allocation5 + $0x28] sm:$0xff] %v61
    %108 = vst [vmem:[#allocation5 + $0x30] sm:$0xff] %v65
    %109 = vst [vmem:[#allocation5 + $0x38] sm:$0xff] %v69
    %110 = vst [vmem:[#allocation5 + $0x40] sm:$0xff] %v73
    %111 = vst [vmem:[#allocation5 + $0x48] sm:$0xff] %v77
    %112 = vst [vmem:[#allocation5 + $0x50] sm:$0xff] %v81
    %113 = vst [vmem:[#allocation5 + $0x58] sm:$0xff] %v85
    %114 = vst [vmem:[#allocation5 + $0x60] sm:$0xff] %v89
    %115 = vst [vmem:[#allocation5 + $0x68] sm:$0xff] %v93
    %116 = vst [vmem:[#allocation5 + $0x70] sm:$0xff] %v97
    %117 = vst [vmem:[#allocation5 + $0x78] sm:$0xff] %v101
    // Predicated region
    $region10: #{tpu_custom_call.1} parent=1 // pred_check
      _
    $region11: #{tpu_custom_call.1} parent=1 // pred_check_branch
      %119 = sbr.rel (0) target = $region13
    $region12: #{tpu_custom_call.1} parent=1 // pred_region
      %s121 = ssub.s32 2048, 2048
      %122 = vsyncadd [#allocation4], %s121
      %s123 = sshll.u32 [#allocation5], 4
      %s124 = int_to_ptr.vmem [resolvable:$true] %s123
      %129 = dma.vmem_to_hbm [thread:$0]  %s124, 2048, %s1, [#allocation4], 128, 128, 8
    $region13: #{tpu_custom_call.1} parent=1 // pred_fallthru
      _
    // Predicated region
    $region14: #{tpu_custom_call.1} parent=1 // pred_check
      _
    $region15: #{tpu_custom_call.1} parent=1 // pred_check_branch
      %131 = sbr.rel (0) target = $region17
    $region16: #{tpu_custom_call.1} parent=1 // pred_region
      %132 = dma.done [#allocation4], 2048
    $region17: #{tpu_custom_call.1} parent=1 // pred_fallthru
      _
    %133 = vsyncpa [#allocation3], 1
    %134 = vsyncpa [#allocation4], 1

// kernel: tpu_custom_call.1
$region0: #{tpu_custom_call.1}
  #allocation0 [shape = 'u32[]', space=smem, size = 0x4, offset = 0x4, fixed_abs, tag = 'smem constant byte address 0x4 - core index']
  #allocation1 [shape = 'u32[144,128]{1,0:T(1,128)}', space=vmem, size = 0x12000, scoped, tag = 'internal scratch']
  #allocation2 [shape = 'f32[256,128]{1,0:T(8,128)}', space=vmem, size = 0x20000, scoped, tag = 'scratch operand']
  %s0 = inlined_call_operand.hbm [shape: f32[2,128,128], index: 0, kind: input, shape index: {}]
  %s1 = inlined_call_operand.hbm [shape: f32[2,128,128], index: 1, kind: input, shape index: {}]
  %s2 = inlined_call_operand.hbm [shape: f32[2,128,128], index: 2, kind: input, shape index: {}]
  %s3 = inlined_call_operand.hbm [shape: f32[2,128,128], index: 3, kind: output, shape index: {}]
  %s4 = sld [smem:[#allocation0]]
  $region64: #{tpu_custom_call.1} parent=0
    _
  %s6 = ssub.s32 1, %s4
  %s7 = scalar_select 0, %s6, %s4
  $region1: #{tpu_custom_call.1} parent=0
    #allocation3 [shape = 'u8[131072]{0}', space=vmem, size = 0x20000, scoped, tag = 'input window, operand 0']
    #allocation4 [shape = 's32[2]{0}', space=sflag, size = 0x8, scoped, tag = 'scoped memory for tpu_custom_call.1']
    #allocation5 [shape = 's32[2]{0}', space=sflag, size = 0x8, scoped, tag = 'scoped memory for tpu_custom_call.1']
    #allocation6 [shape = 'u8[131072]{0}', space=vmem, size = 0x20000, scoped, tag = 'input window, operand 1']
    #allocation7 [shape = 's32[2]{0}', space=sflag, size = 0x8, scoped, tag = 'scoped memory for tpu_custom_call.1']
    #allocation8 [shape = 'u8[131072]{0}', space=vmem, size = 0x20000, scoped, tag = 'input window, operand 2']
    #allocation9 [shape = 'u8[131072]{0}', space=vmem, size = 0x20000, scoped, tag = 'output window, operand 0']
    %8 = vsyncpa [#allocation4], 0
    %s9 = scalar_lea.sflag [#allocation4], 1
    %10 = vsyncpa %s9, 0
    %11 = vsyncpa [#allocation7], 0
    %s12 = scalar_lea.sflag [#allocation7], 1
    %13 = vsyncpa %s12, 0
    %14 = vsyncpa [#allocation5], 0
    %s15 = scalar_lea.sflag [#allocation5], 1
    %16 = vsyncpa %s15, 0
    loop: start=0, step=1, limit=4
    $region2: #{tpu_custom_call.1} parent=1 // loop_pre_header
      _
    $region3: #{tpu_custom_call.1} parent=1 // loop_header
      %s18 = sphi 0, %s22
      %p19 = scmp.ge.s32.totalorder %s18, 4
      %s28 = sphi 0, %s30
      %s31 = sphi 0, %s28
      %s32 = sphi 0, %s31
      %s48 = sphi 0, %s32
      %s54 = sphi 0, %s56
      %s57 = sphi 0, %s54
      %s58 = sphi 0, %s57
      %s74 = sphi 0, %s58
      %s80 = sphi 0, %s82
      %s83 = sphi 0, %s80
      %s84 = sphi 0, %s83
      %s100 = sphi 0, %s84
      %s106 = sphi 0, %s108
      %s109 = sphi 0, %s106
      %s110 = sphi 0, %s109
      %s126 = sphi 0, %s110
    $region4: #{tpu_custom_call.1} parent=1 // loop_header_branch
      %21 = sbr.rel (%p19) target = $region8
    $region5: #{tpu_custom_call.1} parent=1 // loop_body
      %s23 = ssub.s32 %s18, 1
      %s24 = ssub.s32 %s18, 2
      %s25 = sadd.s32 %s18, 1
      %s26 = ssub.s32 %s18, %s25
      %p27 = scmp.eq.s32.totalorder %s26, 0
      %s29 = sadd.s32 %s28, 1
      %s30 = scalar_select %p27, %s28, %s29
      %p33 = pneg %p27
      %p34 = scmp.eq.s32.totalorder %s18, 1
      %p35 = por %p33, %p34
      %p36 = scmp.ne.s32.totalorder %s28, %s31
      %p37 = scmp.eq.s32.totalorder %s18, 0
      %p38 = por %p36, %p37
      %p39 = scmp.ne.s32.totalorder %s28, %s31
      %p40 = scmp.eq.s32.totalorder %s23, 1
      %p41 = por %p39, %p40
      %p42 = scmp.ne.s32.totalorder %s31, %s32
      %p43 = scmp.eq.s32.totalorder %s23, 0
      %p44 = por %p42, %p43
      %p45 = scmp.ne.s32.totalorder %s31, %s32
      %p46 = scmp.eq.s32.totalorder %s24, 1
      %p47 = por %p45, %p46
      %p49 = scmp.ne.s32.totalorder %s32, %s48
      %p50 = scmp.eq.s32.totalorder %s24, 0
      %p51 = por %p49, %p50
      %s52 = ssub.s32 %s18, %s25
      %p53 = scmp.eq.s32.totalorder %s52, 0
      %s55 = sadd.s32 %s54, 1
      %s56 = scalar_select %p53, %s54, %s55
      %p59 = pneg %p53
      %p60 = scmp.eq.s32.totalorder %s18, 1
      %p61 = por %p59, %p60
      %p62 = scmp.ne.s32.totalorder %s54, %s57
      %p63 = scmp.eq.s32.totalorder %s18, 0
      %p64 = por %p62, %p63
      %p65 = scmp.ne.s32.totalorder %s54, %s57
      %p66 = scmp.eq.s32.totalorder %s23, 1
      %p67 = por %p65, %p66
      %p68 = scmp.ne.s32.totalorder %s57, %s58
      %p69 = scmp.eq.s32.totalorder %s23, 0
      %p70 = por %p68, %p69
      %p71 = scmp.ne.s32.totalorder %s57, %s58
      %p72 = scmp.eq.s32.totalorder %s24, 1
      %p73 = por %p71, %p72
      %p75 = scmp.ne.s32.totalorder %s58, %s74
      %p76 = scmp.eq.s32.totalorder %s24, 0
      %p77 = por %p75, %p76
      %s78 = ssub.s32 %s18, %s25
      %p79 = scmp.eq.s32.totalorder %s78, 0
      %s81 = sadd.s32 %s80, 1
      %s82 = scalar_select %p79, %s80, %s81
      %p85 = pneg %p79
      %p86 = scmp.eq.s32.totalorder %s18, 1
      %p87 = por %p85, %p86
      %p88 = scmp.ne.s32.totalorder %s80, %s83
      %p89 = scmp.eq.s32.totalorder %s18, 0
      %p90 = por %p88, %p89
      %p91 = scmp.ne.s32.totalorder %s80, %s83
      %p92 = scmp.eq.s32.totalorder %s23, 1
      %p93 = por %p91, %p92
      %p94 = scmp.ne.s32.totalorder %s83, %s84
      %p95 = scmp.eq.s32.totalorder %s23, 0
      %p96 = por %p94, %p95
      %p97 = scmp.ne.s32.totalorder %s83, %s84
      %p98 = scmp.eq.s32.totalorder %s24, 1
      %p99 = por %p97, %p98
      %p101 = scmp.ne.s32.totalorder %s84, %s100
      %p102 = scmp.eq.s32.totalorder %s24, 0
      %p103 = por %p101, %p102
      %s104 = ssub.s32 %s18, %s25
      %p105 = scmp.eq.s32.totalorder %s104, 0
      %s107 = sadd.s32 %s106, 1
      %s108 = scalar_select %p105, %s106, %s107
      %p111 = pneg %p105
      %p112 = scmp.eq.s32.totalorder %s18, 1
      %p113 = por %p111, %p112
      %p114 = scmp.ne.s32.totalorder %s106, %s109
      %p115 = scmp.eq.s32.totalorder %s18, 0
      %p116 = por %p114, %p115
      %p117 = scmp.ne.s32.totalorder %s106, %s109
      %p118 = scmp.eq.s32.totalorder %s23, 1
      %p119 = por %p117, %p118
      %p120 = scmp.ne.s32.totalorder %s109, %s110
      %p121 = scmp.eq.s32.totalorder %s23, 0
      %p122 = por %p120, %p121
      %p123 = scmp.ne.s32.totalorder %s109, %s110
      %p124 = scmp.eq.s32.totalorder %s24, 1
      %p125 = por %p123, %p124
      %p127 = scmp.ne.s32.totalorder %s110, %s126
      %p128 = scmp.eq.s32.totalorder %s24, 0
      %p129 = por %p127, %p128
      %p130 = scmp.le.s32.totalorder 1, %s18
      %p131 = scmp.lt.s32.totalorder %s18, 3
      %p132 = pnand %p130, %p131
      %p133 = pneg %p132
      // Predicated region
      $region9: #{tpu_custom_call.1} parent=5 // pred_check
        _
      $region10: #{tpu_custom_call.1} parent=5 // pred_check_branch
        %135 = sbr.rel (%p132) target = $region12
      $region11: #{tpu_custom_call.1} parent=5 // pred_region
        %s136 = ssub.s32 %s18, 1
      $region12: #{tpu_custom_call.1} parent=5 // pred_fallthru
        _
      %p137 = scmp.lt.s32.totalorder %s18, 2
      // Predicated region
      $region13: #{tpu_custom_call.1} parent=5 // pred_check
        %p138 = pneg %p137
      $region14: #{tpu_custom_call.1} parent=5 // pred_check_branch
        %140 = sbr.rel (%p138) target = $region16
      $region15: #{tpu_custom_call.1} parent=5 // pred_region
        // Predicated region
        $region17: #{tpu_custom_call.1} parent=15 // pred_check
          %p141 = pneg %p38
        $region18: #{tpu_custom_call.1} parent=15 // pred_check_branch
          %143 = sbr.rel (%p141) target = $region20
        $region19: #{tpu_custom_call.1} parent=15 // pred_region
          %s144 = sand.u32 %s28, 1
          %s145 = scalar_lea.sflag [#allocation4], %s144
          %s146 = sand.u32 %s28, 1
          %s147 = smul.addr %s146, 128
          %s148 = scalar_lea.vmem [#allocation3], %s147
          %s150 = ssub.s32 2048, 2048
          %151 = vsyncadd %s145, %s150
          %s152 = smul.addr %s18, 16
          %s153 = smul.addr %s152, 128
          %s154 = scalar_lea.hbm %s0, %s153
          %s155 = sshll.u32 %s148, 4
          %s156 = int_to_ptr.vmem [resolvable:$true] %s155
          %161 = dma.hbm_to_vmem [thread:$0]  %s154, 2048, %s156, %s145, 128, 128, 8
        $region20: #{tpu_custom_call.1} parent=15 // pred_fallthru
          _
        // Predicated region
        $region21: #{tpu_custom_call.1} parent=15 // pred_check
          %p162 = pneg %p64
        $region22: #{tpu_custom_call.1} parent=15 // pred_check_branch
          %164 = sbr.rel (%p162) target = $region24
        $region23: #{tpu_custom_call.1} parent=15 // pred_region
          %s165 = sand.u32 %s18, 1
          %s166 = scalar_lea.sflag [#allocation7], %s165
          %s167 = sand.u32 %s54, 1
          %s168 = smul.addr %s167, 128
          %s169 = scalar_lea.vmem [#allocation6], %s168
          %s171 = ssub.s32 2048, 2048
          %172 = vsyncadd %s166, %s171
          %s173 = smul.addr %s18, 16
          %s174 = smul.addr %s173, 128
          %s175 = scalar_lea.hbm %s1, %s174
          %s176 = sshll.u32 %s169, 4
          %s177 = int_to_ptr.vmem [resolvable:$true] %s176
          %182 = dma.hbm_to_vmem [thread:$0]  %s175, 2048, %s177, %s166, 128, 128, 8
        $region24: #{tpu_custom_call.1} parent=15 // pred_fallthru
          _
        // Predicated region
        $region25: #{tpu_custom_call.1} parent=15 // pred_check
          %p183 = pneg %p90
        $region26: #{tpu_custom_call.1} parent=15 // pred_check_branch
          %185 = sbr.rel (%p183) target = $region28
        $region27: #{tpu_custom_call.1} parent=15 // pred_region
          %s186 = sand.u32 %s18, 1
          %s187 = scalar_lea.sflag [#allocation7], %s186
          %s188 = sand.u32 %s80, 1
          %s189 = smul.addr %s188, 128
          %s190 = scalar_lea.vmem [#allocation8], %s189
          %s192 = ssub.s32 2048, 2048
          %193 = vsyncadd %s187, %s192
          %s194 = smul.addr %s18, 16
          %s195 = smul.addr %s194, 128
          %s196 = scalar_lea.hbm %s2, %s195
          %s197 = sshll.u32 %s190, 4
          %s198 = int_to_ptr.vmem [resolvable:$true] %s197
          %203 = dma.hbm_to_vmem [thread:$0]  %s196, 2048, %s198, %s187, 128, 128, 8
        $region28: #{tpu_custom_call.1} parent=15 // pred_fallthru
          _
      $region16: #{tpu_custom_call.1} parent=5 // pred_fallthru
        _
      %p204 = scmp.le.s32.totalorder 1, %s18
      %p205 = scmp.lt.s32.totalorder %s18, 3
      %p206 = pnand %p204, %p205
      %p207 = pneg %p206
      // Predicated region
      $region29: #{tpu_custom_call.1} parent=5 // pred_check
        _
      $region30: #{tpu_custom_call.1} parent=5 // pred_check_branch
        %209 = sbr.rel (%p206) target = $region32
      $region31: #{tpu_custom_call.1} parent=5 // pred_region
        %s210 = ssub.s32 %s18, 1
        %s211 = sand.u32 %s31, 1
        %s212 = scalar_lea.sflag [#allocation4], %s211
        %s213 = sand.u32 %s31, 1
        %s214 = smul.addr %s213, 128
        %s215 = scalar_lea.vmem [#allocation3], %s214
        // Predicated region
        $region33: #{tpu_custom_call.1} parent=31 // pred_check
          %p216 = pneg %p44
        $region34: #{tpu_custom_call.1} parent=31 // pred_check_branch
          %218 = sbr.rel (%p216) target = $region36
        $region35: #{tpu_custom_call.1} parent=31 // pred_region
          %219 = dma.done %s212, 2048
        $region36: #{tpu_custom_call.1} parent=31 // pred_fallthru
          _
        %s220 = sand.u32 %s23, 1
        %s221 = scalar_lea.sflag [#allocation7], %s220
        %s222 = sand.u32 %s57, 1
        %s223 = smul.addr %s222, 128
        %s224 = scalar_lea.vmem [#allocation6], %s223
        // Predicated region
        $region37: #{tpu_custom_call.1} parent=31 // pred_check
          %p225 = pneg %p70
        $region38: #{tpu_custom_call.1} parent=31 // pred_check_branch
          %227 = sbr.rel (%p225) target = $region40
        $region39: #{tpu_custom_call.1} parent=31 // pred_region
          %228 = dma.done %s221, 2048
        $region40: #{tpu_custom_call.1} parent=31 // pred_fallthru
          _
        %s229 = sand.u32 %s23, 1
        %s230 = scalar_lea.sflag [#allocation7], %s229
        %s231 = sand.u32 %s83, 1
        %s232 = smul.addr %s231, 128
        %s233 = scalar_lea.vmem [#allocation8], %s232
        // Predicated region
        $region41: #{tpu_custom_call.1} parent=31 // pred_check
          %p234 = pneg %p96
        $region42: #{tpu_custom_call.1} parent=31 // pred_check_branch
          %236 = sbr.rel (%p234) target = $region44
        $region43: #{tpu_custom_call.1} parent=31 // pred_region
          %237 = dma.done %s230, 2048
        $region44: #{tpu_custom_call.1} parent=31 // pred_fallthru
          _
        %s238 = sand.u32 %s31, 1
        %s239 = scalar_lea.sflag [#allocation4], %s238
        %s240 = sand.u32 %s31, 1
        %s241 = smul.addr %s240, 128
        %s242 = scalar_lea.vmem [#allocation3], %s241
        %p243 = pneg %p44
        %p244 = pneg %p41
        %s245 = sand.u32 %s23, 1
        %s246 = scalar_lea.sflag [#allocation7], %s245
        %s247 = sand.u32 %s57, 1
        %s248 = smul.addr %s247, 128
        %s249 = scalar_lea.vmem [#allocation6], %s248
        %p250 = pneg %p70
        %p251 = pneg %p67
        %s252 = sand.u32 %s23, 1
        %s253 = scalar_lea.sflag [#allocation7], %s252
        %s254 = sand.u32 %s83, 1
        %s255 = smul.addr %s254, 128
        %s256 = scalar_lea.vmem [#allocation8], %s255
        %p257 = pneg %p96
        %p258 = pneg %p93
        %p259 = pneg %p122
        %p260 = pneg %p119
        %s261 = sand.u32 %s109, 1
        %s262 = scalar_lea.sflag [#allocation5], %s261
        %s263 = sand.u32 %s109, 1
        %s264 = smul.addr %s263, 128
        %s265 = scalar_lea.vmem [#allocation9], %s264
        %v266 = vlaneseq
        %v267 = vand.u32 %v266, 127
        %v268 = vld [vmem:[%s215] sm:$0xff]
        %v269 = vld [vmem:[%s215 + $0x8] sm:$0xff]
        %v270 = vld [vmem:[%s215 + $0x10] sm:$0xff]
        %v271 = vld [vmem:[%s215 + $0x18] sm:$0xff]
        %v272 = vld [vmem:[%s215 + $0x20] sm:$0xff]
        %v273 = vld [vmem:[%s215 + $0x28] sm:$0xff]
        %v274 = vld [vmem:[%s215 + $0x30] sm:$0xff]
        %v275 = vld [vmem:[%s215 + $0x38] sm:$0xff]
        %v276 = vld [vmem:[%s215 + $0x40] sm:$0xff]
        %v277 = vld [vmem:[%s215 + $0x48] sm:$0xff]
        %v278 = vld [vmem:[%s215 + $0x50] sm:$0xff]
        %v279 = vld [vmem:[%s215 + $0x58] sm:$0xff]
        %v280 = vld [vmem:[%s215 + $0x60] sm:$0xff]
        %v281 = vld [vmem:[%s215 + $0x68] sm:$0xff]
        %v282 = vld [vmem:[%s215 + $0x70] sm:$0xff]
        %v283 = vld [vmem:[%s215 + $0x78] sm:$0xff]
        %v284 = vld [vmem:[%s224] sm:$0xff]
        %v285 = vld [vmem:[%s224 + $0x8] sm:$0xff]
        %v286 = vld [vmem:[%s224 + $0x10] sm:$0xff]
        %v287 = vld [vmem:[%s224 + $0x18] sm:$0xff]
        %v288 = vld [vmem:[%s224 + $0x20] sm:$0xff]
        %v289 = vld [vmem:[%s224 + $0x28] sm:$0xff]
        %v290 = vld [vmem:[%s224 + $0x30] sm:$0xff]
        %v291 = vld [vmem:[%s224 + $0x38] sm:$0xff]
        %v292 = vld [vmem:[%s224 + $0x40] sm:$0xff]
        %v293 = vld [vmem:[%s224 + $0x48] sm:$0xff]
        %v294 = vld [vmem:[%s224 + $0x50] sm:$0xff]
        %v295 = vld [vmem:[%s224 + $0x58] sm:$0xff]
        %v296 = vld [vmem:[%s224 + $0x60] sm:$0xff]
        %v297 = vld [vmem:[%s224 + $0x68] sm:$0xff]
        %v298 = vld [vmem:[%s224 + $0x70] sm:$0xff]
        %v299 = vld [vmem:[%s224 + $0x78] sm:$0xff]
        %v300 = vld [vmem:[%s233] sm:$0xff]
        %v301 = vld [vmem:[%s233 + $0x8] sm:$0xff]
        %v302 = vld [vmem:[%s233 + $0x10] sm:$0xff]
        %v303 = vld [vmem:[%s233 + $0x18] sm:$0xff]
        %v304 = vld [vmem:[%s233 + $0x20] sm:$0xff]
        %v305 = vld [vmem:[%s233 + $0x28] sm:$0xff]
        %v306 = vld [vmem:[%s233 + $0x30] sm:$0xff]
        %v307 = vld [vmem:[%s233 + $0x38] sm:$0xff]
        %v308 = vld [vmem:[%s233 + $0x40] sm:$0xff]
        %v309 = vld [vmem:[%s233 + $0x48] sm:$0xff]
        %v310 = vld [vmem:[%s233 + $0x50] sm:$0xff]
        %v311 = vld [vmem:[%s233 + $0x58] sm:$0xff]
        %v312 = vld [vmem:[%s233 + $0x60] sm:$0xff]
        %v313 = vld [vmem:[%s233 + $0x68] sm:$0xff]
        %v314 = vld [vmem:[%s233 + $0x70] sm:$0xff]
        %v315 = vld [vmem:[%s233 + $0x78] sm:$0xff]
        %316 = vst [vmem:[#allocation2] sm:$0xff] %v300
        %317 = vst [vmem:[#allocation2 + $0x8] sm:$0xff] %v301
        %318 = vst [vmem:[#allocation2 + $0x10] sm:$0xff] %v302
        %319 = vst [vmem:[#allocation2 + $0x18] sm:$0xff] %v303
        %320 = vst [vmem:[#allocation2 + $0x20] sm:$0xff] %v304
        %321 = vst [vmem:[#allocation2 + $0x28] sm:$0xff] %v305
        %322 = vst [vmem:[#allocation2 + $0x30] sm:$0xff] %v306
        %323 = vst [vmem:[#allocation2 + $0x38] sm:$0xff] %v307
        %324 = vst [vmem:[#allocation2 + $0x40] sm:$0xff] %v308
        %325 = vst [vmem:[#allocation2 + $0x48] sm:$0xff] %v309
        %326 = vst [vmem:[#allocation2 + $0x50] sm:$0xff] %v310
        %327 = vst [vmem:[#allocation2 + $0x58] sm:$0xff] %v311
        %328 = vst [vmem:[#allocation2 + $0x60] sm:$0xff] %v312
        %329 = vst [vmem:[#allocation2 + $0x68] sm:$0xff] %v313
        %330 = vst [vmem:[#allocation2 + $0x70] sm:$0xff] %v314
        %331 = vst [vmem:[#allocation2 + $0x78] sm:$0xff] %v315
        %332 = vst [vmem:[#allocation2 + $0x80] sm:$0xff] %v300
        %333 = vst [vmem:[#allocation2 + $0x88] sm:$0xff] %v301
        %334 = vst [vmem:[#allocation2 + $0x90] sm:$0xff] %v302
        %335 = vst [vmem:[#allocation2 + $0x98] sm:$0xff] %v303
        %336 = vst [vmem:[#allocation2 + $0xa0] sm:$0xff] %v304
        %337 = vst [vmem:[#allocation2 + $0xa8] sm:$0xff] %v305
        %338 = vst [vmem:[#allocation2 + $0xb0] sm:$0xff] %v306
        %339 = vst [vmem:[#allocation2 + $0xb8] sm:$0xff] %v307
        %340 = vst [vmem:[#allocation2 + $0xc0] sm:$0xff] %v308
        %341 = vst [vmem:[#allocation2 + $0xc8] sm:$0xff] %v309
        %342 = vst [vmem:[#allocation2 + $0xd0] sm:$0xff] %v310
        %343 = vst [vmem:[#allocation2 + $0xd8] sm:$0xff] %v311
        %344 = vst [vmem:[#allocation2 + $0xe0] sm:$0xff] %v312
        %345 = vst [vmem:[#allocation2 + $0xe8] sm:$0xff] %v313
        %346 = vst [vmem:[#allocation2 + $0xf0] sm:$0xff] %v314
        %347 = vst [vmem:[#allocation2 + $0xf8] sm:$0xff] %v315
        %348 = vmatprep.subr.mxu0 0.0
        %349 = vmatpush1.xpose.msra.mxu0 %v284
        %350 = vmatprep.subr.mxu0 0.0
        %351 = vmatpush1.xpose.msra.mxu0 %v285
        %352 = vmatprep.subr.mxu0 0.0
        %353 = vmatpush1.xpose.msra.mxu0 %v286
        %354 = vmatprep.subr.mxu0 0.0
        %355 = vmatpush1.xpose.msra.mxu0 %v287
        %356 = vmatprep.subr.mxu0 0.0
        %357 = vmatpush1.xpose.msra.mxu0 %v288
        %358 = vmatprep.subr.mxu0 0.0
        %359 = vmatpush1.xpose.msra.mxu0 %v289
        %360 = vmatprep.subr.mxu0 0.0
        %361 = vmatpush1.xpose.msra.mxu0 %v290
        %362 = vmatprep.subr.mxu0 0.0
        %363 = vmatpush1.xpose.msra.mxu0 %v291
        %364 = vmatprep.subr.mxu0 0.0
        %365 = vmatpush1.xpose.msra.mxu0 %v292
        %366 = vmatprep.subr.mxu0 0.0
        %367 = vmatpush1.xpose.msra.mxu0 %v293
        %368 = vmatprep.subr.mxu0 0.0
        %369 = vmatpush1.xpose.msra.mxu0 %v294
        %370 = vmatprep.subr.mxu0 0.0
        %371 = vmatpush1.xpose.msra.mxu0 %v295
        %372 = vmatprep.subr.mxu0 0.0
        %373 = vmatpush1.xpose.msra.mxu0 %v296
        %374 = vmatprep.subr.mxu0 0.0
        %375 = vmatpush1.xpose.msra.mxu0 %v297
        %376 = vmatprep.subr.mxu0 0.0
        %377 = vmatpush1.xpose.msra.mxu0 %v298
        %378 = vmatprep.subr.mxu0 0.0
        %379 = vmatpush1.xpose.msra.mxu0 %v299
        %380 = vmatprep.subr.mxu0 0.0
        %381 = vmatpush1.xpose.msra.mxu0 0.0
        %382 = vmatprep.subr.mxu0 0.0
        %383 = vmatpush1.xpose.msra.mxu0 0.0
        %384 = vmatprep.subr.mxu0 0.0
        %385 = vmatpush1.xpose.msra.mxu0 0.0
        %386 = vmatprep.subr.mxu0 0.0
        %387 = vmatpush1.xpose.msra.mxu0 0.0
        %388 = vmatprep.subr.mxu0 0.0
        %389 = vmatpush1.xpose.msra.mxu0 0.0
        %390 = vmatprep.subr.mxu0 0.0
        %391 = vmatpush1.xpose.msra.mxu0 0.0
        %392 = vmatprep.subr.mxu0 0.0
        %393 = vmatpush1.xpose.msra.mxu0 0.0
        %394 = vmatprep.subr.mxu0 0.0
        %395 = vmatpush1.xpose.msra.mxu0 0.0
        %396 = vmatprep.subr.mxu0 0.0
        %397 = vmatpush1.xpose.msra.mxu0 0.0
        %398 = vmatprep.subr.mxu0 0.0
        %399 = vmatpush1.xpose.msra.mxu0 0.0
        %400 = vmatprep.subr.mxu0 0.0
        %401 = vmatpush1.xpose.msra.mxu0 0.0
        %402 = vmatprep.subr.mxu0 0.0
        %403 = vmatpush1.xpose.msra.mxu0 0.0
        %404 = vmatprep.subr.mxu0 0.0
        %405 = vmatpush1.xpose.msra.mxu0 0.0
        %406 = vmatprep.subr.mxu0 0.0
        %407 = vmatpush1.xpose.msra.mxu0 0.0
        %408 = vmatprep.subr.mxu0 0.0
        %409 = vmatpush1.xpose.msra.mxu0 0.0
        %410 = vmatprep.subr.mxu0 0.0
        %411 = vmatpush1.xpose.msra.mxu0 0.0
        %412 = vmatprep.mubr.f32.mxu0 0.0
        %413 = vmatmul.mubr.f32.gmra.mrb[0].mxu0 %v268
        %v414 = vpop.f32.mrb[0].mxu0
        %v415 = vadd.f32 0.0, %v414
        %v416 = vpop.f32.mrb[0].mxu0
        %417 = vmatprep.mubr.f32.mxu0 0.0
        %418 = vmatmul.mubr.f32.gmra.mrb[0].mxu0 %v269
        %v419 = vpop.f32.mrb[0].mxu0
        %v420 = vadd.f32 0.0, %v419
        %v421 = vpop.f32.mrb[0].mxu0
        %422 = vmatprep.mubr.f32.mxu0 0.0
        %423 = vmatmul.mubr.f32.gmra.mrb[0].mxu0 %v270
        %v424 = vpop.f32.mrb[0].mxu0
        %v425 = vadd.f32 0.0, %v424
        %v426 = vpop.f32.mrb[0].mxu0
        %427 = vmatprep.mubr.f32.mxu0 0.0
        %428 = vmatmul.mubr.f32.gmra.mrb[0].mxu0 %v271
        %v429 = vpop.f32.mrb[0].mxu0
        %v430 = vadd.f32 0.0, %v429
        %v431 = vpop.f32.mrb[0].mxu0
        %432 = vmatprep.mubr.f32.mxu0 0.0
        %433 = vmatmul.mubr.f32.gmra.mrb[0].mxu0 %v272
        %v434 = vpop.f32.mrb[0].mxu0
        %v435 = vadd.f32 0.0, %v434
        %v436 = vpop.f32.mrb[0].mxu0
        %437 = vmatprep.mubr.f32.mxu0 0.0
        %438 = vmatmul.mubr.f32.gmra.mrb[0].mxu0 %v273
        %v439 = vpop.f32.mrb[0].mxu0
        %v440 = vadd.f32 0.0, %v439
        %v441 = vpop.f32.mrb[0].mxu0
        %442 = vmatprep.mubr.f32.mxu0 0.0
        %443 = vmatmul.mubr.f32.gmra.mrb[0].mxu0 %v274
        %v444 = vpop.f32.mrb[0].mxu0
        %v445 = vadd.f32 0.0, %v444
        %v446 = vpop.f32.mrb[0].mxu0
        %447 = vmatprep.mubr.f32.mxu0 0.0
        %448 = vmatmul.mubr.f32.gmra.mrb[0].mxu0 %v275
        %v449 = vpop.f32.mrb[0].mxu0
        %v450 = vadd.f32 0.0, %v449
        %v451 = vpop.f32.mrb[0].mxu0
        %452 = vmatprep.mubr.f32.mxu0 0.0
        %453 = vmatmul.mubr.f32.gmra.mrb[0].mxu0 %v276
        %v454 = vpop.f32.mrb[0].mxu0
        %v455 = vadd.f32 0.0, %v454
        %v456 = vpop.f32.mrb[0].mxu0
        %457 = vmatprep.mubr.f32.mxu0 0.0
        %458 = vmatmul.mubr.f32.gmra.mrb[0].mxu0 %v277
        %v459 = vpop.f32.mrb[0].mxu0
        %v460 = vadd.f32 0.0, %v459
        %v461 = vpop.f32.mrb[0].mxu0
        %462 = vmatprep.mubr.f32.mxu0 0.0
        %463 = vmatmul.mubr.f32.gmra.mrb[0].mxu0 %v278
        %v464 = vpop.f32.mrb[0].mxu0
        %v465 = vadd.f32 0.0, %v464
        %v466 = vpop.f32.mrb[0].mxu0
        %467 = vmatprep.mubr.f32.mxu0 0.0
        %468 = vmatmul.mubr.f32.gmra.mrb[0].mxu0 %v279
        %v469 = vpop.f32.mrb[0].mxu0
        %v470 = vadd.f32 0.0, %v469
        %v471 = vpop.f32.mrb[0].mxu0
        %472 = vmatprep.mubr.f32.mxu0 0.0
        %473 = vmatmul.mubr.f32.gmra.mrb[0].mxu0 %v280
        %v474 = vpop.f32.mrb[0].mxu0
        %v475 = vadd.f32 0.0, %v474
        %v476 = vpop.f32.mrb[0].mxu0
        %477 = vmatprep.mubr.f32.mxu0 0.0
        %478 = vmatmul.mubr.f32.gmra.mrb[0].mxu0 %v281
        %v479 = vpop.f32.mrb[0].mxu0
        %v480 = vadd.f32 0.0, %v479
        %v481 = vpop.f32.mrb[0].mxu0
        %482 = vmatprep.mubr.f32.mxu0 0.0
        %483 = vmatmul.mubr.f32.gmra.mrb[0].mxu0 %v282
        %v484 = vpop.f32.mrb[0].mxu0
        %v485 = vadd.f32 0.0, %v484
        %v486 = vpop.f32.mrb[0].mxu0
        %487 = vmatprep.mubr.f32.mxu0 0.0
        %488 = vmatmul.mubr.f32.gmra.mrb[0].mxu0 %v283
        %v489 = vpop.f32.mrb[0].mxu0
        %v490 = vadd.f32 0.0, %v489
        %v491 = vpop.f32.mrb[0].mxu0
        %492 = vdwg.mxu0
        %v493 = vlaneseq
        %v494 = vshrl.u32 %v493, 7
        %v495 = vadd.s32 %v494, 8
        %v496 = vadd.s32 %v494, 16
        %v497 = vadd.s32 %v494, 24
        %v498 = vadd.s32 %v494, 32
        %v499 = vadd.s32 %v494, 40
        %v500 = vadd.s32 %v494, 48
        %v501 = vadd.s32 %v494, 56
        %v502 = vadd.s32 %v494, 64
        %v503 = vadd.s32 %v494, 72
        %v504 = vadd.s32 %v494, 80
        %v505 = vadd.s32 %v494, 88
        %v506 = vadd.s32 %v494, 96
        %v507 = vadd.s32 %v494, 104
        %v508 = vadd.s32 %v494, 112
        %v509 = vadd.s32 %v494, 120
        %v510 = vsub.s32 %v494, %v267
        %v511 = vsub.s32 %v495, %v267
        %v512 = vsub.s32 %v496, %v267
        %v513 = vsub.s32 %v497, %v267
        %v514 = vsub.s32 %v498, %v267
        %v515 = vsub.s32 %v499, %v267
        %v516 = vsub.s32 %v500, %v267
        %v517 = vsub.s32 %v501, %v267
        %v518 = vsub.s32 %v502, %v267
        %v519 = vsub.s32 %v503, %v267
        %v520 = vsub.s32 %v504, %v267
        %v521 = vsub.s32 %v505, %v267
        %v522 = vsub.s32 %v506, %v267
        %v523 = vsub.s32 %v507, %v267
        %v524 = vsub.s32 %v508, %v267
        %v525 = vsub.s32 %v509, %v267
        %vm526 = vcmp.lt.s32.totalorder %v510, 0
        %vm527 = vcmp.lt.s32.totalorder %v511, 0
        %vm528 = vcmp.lt.s32.totalorder %v512, 0
        %vm529 = vcmp.lt.s32.totalorder %v513, 0
        %vm530 = vcmp.lt.s32.totalorder %v514, 0
        %vm531 = vcmp.lt.s32.totalorder %v515, 0
        %vm532 = vcmp.lt.s32.totalorder %v516, 0
        %vm533 = vcmp.lt.s32.totalorder %v517, 0
        %vm534 = vcmp.lt.s32.totalorder %v518, 0
        %vm535 = vcmp.lt.s32.totalorder %v519, 0
        %vm536 = vcmp.lt.s32.totalorder %v520, 0
        %vm537 = vcmp.lt.s32.totalorder %v521, 0
        %vm538 = vcmp.lt.s32.totalorder %v522, 0
        %vm539 = vcmp.lt.s32.totalorder %v523, 0
        %vm540 = vcmp.lt.s32.totalorder %v524, 0
        %vm541 = vcmp.lt.s32.totalorder %v525, 0
        %v542 = vadd.s32 %v510, 128
        %v543 = vadd.s32 %v511, 128
        %v544 = vadd.s32 %v512, 128
        %v545 = vadd.s32 %v513, 128
        %v546 = vadd.s32 %v514, 128
        %v547 = vadd.s32 %v515, 128
        %v548 = vadd.s32 %v516, 128
        %v549 = vadd.s32 %v517, 128
        %v550 = vadd.s32 %v518, 128
        %v551 = vadd.s32 %v519, 128
        %v552 = vadd.s32 %v520, 128
        %v553 = vadd.s32 %v521, 128
        %v554 = vadd.s32 %v522, 128
        %v555 = vadd.s32 %v523, 128
        %v556 = vadd.s32 %v524, 128
        %v557 = vadd.s32 %v525, 128
        %v558 = vsel %vm526, %v542, %v510
        %v559 = vsel %vm527, %v543, %v511
        %v560 = vsel %vm528, %v544, %v512
        %v561 = vsel %vm529, %v545, %v513
        %v562 = vsel %vm530, %v546, %v514
        %v563 = vsel %vm531, %v547, %v515
        %v564 = vsel %vm532, %v548, %v516
        %v565 = vsel %vm533, %v549, %v517
        %v566 = vsel %vm534, %v550, %v518
        %v567 = vsel %vm535, %v551, %v519
        %v568 = vsel %vm536, %v552, %v520
        %v569 = vsel %vm537, %v553, %v521
        %v570 = vsel %vm538, %v554, %v522
        %v571 = vsel %vm539, %v555, %v523
        %v572 = vsel %vm540, %v556, %v524
        %v573 = vsel %vm541, %v557, %v525
        loop: start=0, step=1, limit=128
        $region45: #{tpu_custom_call.1} parent=31 // loop_pre_header
          _
        $region46: #{tpu_custom_call.1} parent=31 // loop_header
          %s575 = sphi 0, %s579
          %p576 = scmp.ge.s32.totalorder %s575, 128
          %v580 = vphi 0.0, %v642
        $region47: #{tpu_custom_call.1} parent=31 // loop_header_branch
          %578 = sbr.rel (%p576) target = $region51
        $region48: #{tpu_custom_call.1} parent=31 // loop_body
          %v581 = vstv %s575
          %vm582 = vcmp.eq.s32.totalorder %v558, %v581
          %vm583 = vcmp.eq.s32.totalorder %v559, %v581
          %vm584 = vcmp.eq.s32.totalorder %v560, %v581
          %vm585 = vcmp.eq.s32.totalorder %v561, %v581
          %vm586 = vcmp.eq.s32.totalorder %v562, %v581
          %vm587 = vcmp.eq.s32.totalorder %v563, %v581
          %vm588 = vcmp.eq.s32.totalorder %v564, %v581
          %vm589 = vcmp.eq.s32.totalorder %v565, %v581
          %vm590 = vcmp.eq.s32.totalorder %v566, %v581
          %vm591 = vcmp.eq.s32.totalorder %v567, %v581
          %vm592 = vcmp.eq.s32.totalorder %v568, %v581
          %vm593 = vcmp.eq.s32.totalorder %v569, %v581
          %vm594 = vcmp.eq.s32.totalorder %v570, %v581
          %vm595 = vcmp.eq.s32.totalorder %v571, %v581
          %vm596 = vcmp.eq.s32.totalorder %v572, %v581
          %vm597 = vcmp.eq.s32.totalorder %v573, %v581
          %v598 = vsel %vm582, %v415, 0.0
          %v599 = vsel %vm583, %v420, 0.0
          %v600 = vsel %vm584, %v425, 0.0
          %v601 = vsel %vm585, %v430, 0.0
          %v602 = vsel %vm586, %v435, 0.0
          %v603 = vsel %vm587, %v440, 0.0
          %v604 = vsel %vm588, %v445, 0.0
          %v605 = vsel %vm589, %v450, 0.0
          %v606 = vsel %vm590, %v455, 0.0
          %v607 = vsel %vm591, %v460, 0.0
          %v608 = vsel %vm592, %v465, 0.0
          %v609 = vsel %vm593, %v470, 0.0
          %v610 = vsel %vm594, %v475, 0.0
          %v611 = vsel %vm595, %v480, 0.0
          %v612 = vsel %vm596, %v485, 0.0
          %v613 = vsel %vm597, %v490, 0.0
          %v614 = vadd.f32 %v598, %v599
          %v615 = vadd.f32 %v614, %v600
          %v616 = vadd.f32 %v615, %v601
          %v617 = vadd.f32 %v616, %v602
          %v618 = vadd.f32 %v617, %v603
          %v619 = vadd.f32 %v618, %v604
          %v620 = vadd.f32 %v619, %v605
          %v621 = vadd.f32 %v620, %v606
          %v622 = vadd.f32 %v621, %v607
          %v623 = vadd.f32 %v622, %v608
          %v624 = vadd.f32 %v623, %v609
          %v625 = vadd.f32 %v624, %v610
          %v626 = vadd.f32 %v625, %v611
          %v627 = vadd.f32 %v626, %v612
          %v628 = vadd.f32 %v627, %v613
          %629 = vadd.xlane.f32.xlu0 %v628
          %v630 = vpop.xlane.xlu0 %629
          %v631 = vrot.slane %v630, 4
          %v632 = vadd.f32 %v630, %v631
          %v633 = vrot.slane %v632, 2
          %v634 = vadd.f32 %v632, %v633
          %v635 = vrot.slane %v634, 1
          %v636 = vadd.f32 %v634, %v635
          %s637 = vtos %v636
          %s638 = smul.f32 %s637, 0.0078125
          %vm639 = vcmp.eq.s32.totalorder %v267, %v581
          %v640 = vstv %s638
          %v641 = vsel %vm639, %v640, 0.0
          %v642 = vadd.f32 %v580, %v641
        $region49: #{tpu_custom_call.1} parent=31 // loop_footer
          %s579 = sadd.s32 1, %s575
        $region50: #{tpu_custom_call.1} parent=31 // loop_footer_branch
          %574 = sbr.rel target = $region46
        $region51: #{tpu_custom_call.1} parent=31 // loop_exit
          _
        %643 = vmax.xlane.f32.xlu0 %v580
        %v644 = vpop.xlane.xlu0 %643
        %s645 = vtos %v644
        %v646 = vstv %s645
        %vm647 = vcmp.eq.f32.partialorder %v580, %v646
        %v648 = vsel %vm647, %v267, 128
        %v649 = vand.u32 %v648, 65535
        %v650 = vshra.s32 %v648, 16
        %v651 = vcvt.s32.f32 %v649
        %v652 = vcvt.s32.f32 %v650
        %653 = vmin.xlane.f32.xlu0 %v652
        %v654 = vpop.xlane.xlu0 %653
        %vm655 = vcmp.eq.f32.partialorder %v652, %v654
        %v656 = vsel %vm655, %v651, inf
        %657 = vmin.xlane.f32.xlu0 %v656
        %v658 = vpop.xlane.xlu0 %657
        %v659 = vcvt.f32.s32 %v658
        %v660 = vcvt.f32.s32 %v654
        %v661 = vshll.u32 %v660, 16
        %v662 = vadd.s32 %v661, %v659
        %s663 = vtos %v662
        %v664 = vstv %s663
        %vm665 = vcmp.eq.s32.totalorder %v267, %v664
        %vm666 = vmand %vm647, %vm665
        %v667 = vsel %vm666, -inf, %v580
        %668 = vmax.xlane.f32.xlu0 %v667
        %v669 = vpop.xlane.xlu0 %668
        %s670 = vtos %v669
        %v671 = vstv %s670
        %vm672 = vcmp.eq.f32.partialorder %v667, %v671
        %v673 = vsel %vm672, %v267, 128
        %v674 = vand.u32 %v673, 65535
        %v675 = vshra.s32 %v673, 16
        %v676 = vcvt.s32.f32 %v674
        %v677 = vcvt.s32.f32 %v675
        %678 = vmin.xlane.f32.xlu0 %v677
        %v679 = vpop.xlane.xlu0 %678
        %vm680 = vcmp.eq.f32.partialorder %v677, %v679
        %v681 = vsel %vm680, %v676, inf
        %682 = vmin.xlane.f32.xlu0 %v681
        %v683 = vpop.xlane.xlu0 %682
        %v684 = vcvt.f32.s32 %v683
        %v685 = vcvt.f32.s32 %v679
        %v686 = vshll.u32 %v685, 16
        %v687 = vadd.s32 %v686, %v684
        %s688 = vtos %v687
        %v689 = vstv %s688
        %vm690 = vcmp.eq.s32.totalorder %v267, %v689
        %vm691 = vmand %vm672, %vm690
        %v692 = vsel %vm691, -inf, %v667
        %693 = vmax.xlane.f32.xlu0 %v692
        %v694 = vpop.xlane.xlu0 %693
        %s695 = vtos %v694
        %v696 = vstv %s695
        %vm697 = vcmp.eq.f32.partialorder %v692, %v696
        %v698 = vsel %vm697, %v267, 128
        %v699 = vand.u32 %v698, 65535
        %v700 = vshra.s32 %v698, 16
        %v701 = vcvt.s32.f32 %v699
        %v702 = vcvt.s32.f32 %v700
        %703 = vmin.xlane.f32.xlu0 %v702
        %v704 = vpop.xlane.xlu0 %703
        %vm705 = vcmp.eq.f32.partialorder %v702, %v704
        %v706 = vsel %vm705, %v701, inf
        %707 = vmin.xlane.f32.xlu0 %v706
        %v708 = vpop.xlane.xlu0 %707
        %v709 = vcvt.f32.s32 %v708
        %v710 = vcvt.f32.s32 %v704
        %v711 = vshll.u32 %v710, 16
        %v712 = vadd.s32 %v711, %v709
        %s713 = vtos %v712
        %v714 = vstv %s713
        %vm715 = vcmp.eq.s32.totalorder %v267, %v714
        %vm716 = vmand %vm697, %vm715
        %v717 = vsel %vm716, -inf, %v692
        %718 = vmax.xlane.f32.xlu0 %v717
        %v719 = vpop.xlane.xlu0 %718
        %s720 = vtos %v719
        %v721 = vstv %s720
        %vm722 = vcmp.eq.f32.partialorder %v717, %v721
        %v723 = vsel %vm722, %v267, 128
        %v724 = vand.u32 %v723, 65535
        %v725 = vshra.s32 %v723, 16
        %v726 = vcvt.s32.f32 %v724
        %v727 = vcvt.s32.f32 %v725
        %728 = vmin.xlane.f32.xlu0 %v727
        %v729 = vpop.xlane.xlu0 %728
        %vm730 = vcmp.eq.f32.partialorder %v727, %v729
        %v731 = vsel %vm730, %v726, inf
        %732 = vmin.xlane.f32.xlu0 %v731
        %v733 = vpop.xlane.xlu0 %732
        %v734 = vcvt.f32.s32 %v733
        %v735 = vcvt.f32.s32 %v729
        %v736 = vshll.u32 %v735, 16
        %v737 = vadd.s32 %v736, %v734
        %s738 = vtos %v737
        %s739 = ssub.f32 %s645, %s645
        %v740 = vstv %s739
        %v741 = vmul.f32 %v740, 1.442695
        %v742 = vpow.pop %v741
        %s743 = vtos %v742
        %s744 = ssub.f32 %s670, %s645
        %v745 = vstv %s744
        %v746 = vmul.f32 %v745, 1.442695
        %v747 = vpow.pop %v746
        %s748 = vtos %v747
        %s749 = ssub.f32 %s695, %s645
        %v750 = vstv %s749
        %v751 = vmul.f32 %v750, 1.442695
        %v752 = vpow.pop %v751
        %s753 = vtos %v752
        %s754 = ssub.f32 %s720, %s645
        %v755 = vstv %s754
        %v756 = vmul.f32 %v755, 1.442695
        %v757 = vpow.pop %v756
        %s758 = vtos %v757
        %s759 = sadd.f32 %s743, %s748
        %s760 = sadd.f32 %s759, %s753
        %s761 = sadd.f32 %s760, %s758
        %v762 = vstv %s761
        %v763 = vrcp.pop %v762
        %s764 = vtos %v763
        %s765 = scalar_lea.vmem [#allocation2], %s663
        %v766 = vld [vmem:[%s765] sm:$0xff]
        %v767 = vld [vmem:[%s765 + $0x8] sm:$0xff]
        %v768 = vld [vmem:[%s765 + $0x10] sm:$0xff]
        %v769 = vld [vmem:[%s765 + $0x18] sm:$0xff]
        %v770 = vld [vmem:[%s765 + $0x20] sm:$0xff]
        %v771 = vld [vmem:[%s765 + $0x28] sm:$0xff]
        %v772 = vld [vmem:[%s765 + $0x30] sm:$0xff]
        %v773 = vld [vmem:[%s765 + $0x38] sm:$0xff]
        %v774 = vld [vmem:[%s765 + $0x40] sm:$0xff]
        %v775 = vld [vmem:[%s765 + $0x48] sm:$0xff]
        %v776 = vld [vmem:[%s765 + $0x50] sm:$0xff]
        %v777 = vld [vmem:[%s765 + $0x58] sm:$0xff]
        %v778 = vld [vmem:[%s765 + $0x60] sm:$0xff]
        %v779 = vld [vmem:[%s765 + $0x68] sm:$0xff]
        %v780 = vld [vmem:[%s765 + $0x70] sm:$0xff]
        %v781 = vld [vmem:[%s765 + $0x78] sm:$0xff]
        %v782 = vstv %s743
        %v783 = vmul.f32 %v766, %v782
        %v784 = vmul.f32 %v767, %v782
        %v785 = vmul.f32 %v768, %v782
        %v786 = vmul.f32 %v769, %v782
        %v787 = vmul.f32 %v770, %v782
        %v788 = vmul.f32 %v771, %v782
        %v789 = vmul.f32 %v772, %v782
        %v790 = vmul.f32 %v773, %v782
        %v791 = vmul.f32 %v774, %v782
        %v792 = vmul.f32 %v775, %v782
        %v793 = vmul.f32 %v776, %v782
        %v794 = vmul.f32 %v777, %v782
        %v795 = vmul.f32 %v778, %v782
        %v796 = vmul.f32 %v779, %v782
        %v797 = vmul.f32 %v780, %v782
        %v798 = vmul.f32 %v781, %v782
        %799 = vst [vmem:[%s265] sm:$0xff] %v783
        %800 = vst [vmem:[%s265 + $0x8] sm:$0xff] %v784
        %801 = vst [vmem:[%s265 + $0x10] sm:$0xff] %v785
        %802 = vst [vmem:[%s265 + $0x18] sm:$0xff] %v786
        %803 = vst [vmem:[%s265 + $0x20] sm:$0xff] %v787
        %804 = vst [vmem:[%s265 + $0x28] sm:$0xff] %v788
        %805 = vst [vmem:[%s265 + $0x30] sm:$0xff] %v789
        %806 = vst [vmem:[%s265 + $0x38] sm:$0xff] %v790
        %807 = vst [vmem:[%s265 + $0x40] sm:$0xff] %v791
        %808 = vst [vmem:[%s265 + $0x48] sm:$0xff] %v792
        %809 = vst [vmem:[%s265 + $0x50] sm:$0xff] %v793
        %810 = vst [vmem:[%s265 + $0x58] sm:$0xff] %v794
        %811 = vst [vmem:[%s265 + $0x60] sm:$0xff] %v795
        %812 = vst [vmem:[%s265 + $0x68] sm:$0xff] %v796
        %813 = vst [vmem:[%s265 + $0x70] sm:$0xff] %v797
        %814 = vst [vmem:[%s265 + $0x78] sm:$0xff] %v798
        %v815 = vld [vmem:[%s265] sm:$0xff]
        %v816 = vld [vmem:[%s265 + $0x8] sm:$0xff]
        %v817 = vld [vmem:[%s265 + $0x10] sm:$0xff]
        %v818 = vld [vmem:[%s265 + $0x18] sm:$0xff]
        %v819 = vld [vmem:[%s265 + $0x20] sm:$0xff]
        %v820 = vld [vmem:[%s265 + $0x28] sm:$0xff]
        %v821 = vld [vmem:[%s265 + $0x30] sm:$0xff]
        %v822 = vld [vmem:[%s265 + $0x38] sm:$0xff]
        %v823 = vld [vmem:[%s265 + $0x40] sm:$0xff]
        %v824 = vld [vmem:[%s265 + $0x48] sm:$0xff]
        %v825 = vld [vmem:[%s265 + $0x50] sm:$0xff]
        %v826 = vld [vmem:[%s265 + $0x58] sm:$0xff]
        %v827 = vld [vmem:[%s265 + $0x60] sm:$0xff]
        %v828 = vld [vmem:[%s265 + $0x68] sm:$0xff]
        %v829 = vld [vmem:[%s265 + $0x70] sm:$0xff]
        %v830 = vld [vmem:[%s265 + $0x78] sm:$0xff]
        %s831 = scalar_lea.vmem [#allocation2], %s688
        %v832 = vld [vmem:[%s831] sm:$0xff]
        %v833 = vld [vmem:[%s831 + $0x8] sm:$0xff]
        %v834 = vld [vmem:[%s831 + $0x10] sm:$0xff]
        %v835 = vld [vmem:[%s831 + $0x18] sm:$0xff]
        %v836 = vld [vmem:[%s831 + $0x20] sm:$0xff]
        %v837 = vld [vmem:[%s831 + $0x28] sm:$0xff]
        %v838 = vld [vmem:[%s831 + $0x30] sm:$0xff]
        %v839 = vld [vmem:[%s831 + $0x38] sm:$0xff]
        %v840 = vld [vmem:[%s831 + $0x40] sm:$0xff]
        %v841 = vld [vmem:[%s831 + $0x48] sm:$0xff]
        %v842 = vld [vmem:[%s831 + $0x50] sm:$0xff]
        %v843 = vld [vmem:[%s831 + $0x58] sm:$0xff]
        %v844 = vld [vmem:[%s831 + $0x60] sm:$0xff]
        %v845 = vld [vmem:[%s831 + $0x68] sm:$0xff]
        %v846 = vld [vmem:[%s831 + $0x70] sm:$0xff]
        %v847 = vld [vmem:[%s831 + $0x78] sm:$0xff]
        %v848 = vstv %s748
        %v849 = vmul.f32 %v832, %v848
        %v850 = vmul.f32 %v833, %v848
        %v851 = vmul.f32 %v834, %v848
        %v852 = vmul.f32 %v835, %v848
        %v853 = vmul.f32 %v836, %v848
        %v854 = vmul.f32 %v837, %v848
        %v855 = vmul.f32 %v838, %v848
        %v856 = vmul.f32 %v839, %v848
        %v857 = vmul.f32 %v840, %v848
        %v858 = vmul.f32 %v841, %v848
        %v859 = vmul.f32 %v842, %v848
        %v860 = vmul.f32 %v843, %v848
        %v861 = vmul.f32 %v844, %v848
        %v862 = vmul.f32 %v845, %v848
        %v863 = vmul.f32 %v846, %v848
        %v864 = vmul.f32 %v847, %v848
        %v865 = vadd.f32 %v815, %v849
        %v866 = vadd.f32 %v816, %v850
        %v867 = vadd.f32 %v817, %v851
        %v868 = vadd.f32 %v818, %v852
        %v869 = vadd.f32 %v819, %v853
        %v870 = vadd.f32 %v820, %v854
        %v871 = vadd.f32 %v821, %v855
        %v872 = vadd.f32 %v822, %v856
        %v873 = vadd.f32 %v823, %v857
        %v874 = vadd.f32 %v824, %v858
        %v875 = vadd.f32 %v825, %v859
        %v876 = vadd.f32 %v826, %v860
        %v877 = vadd.f32 %v827, %v861
        %v878 = vadd.f32 %v828, %v862
        %v879 = vadd.f32 %v829, %v863
        %v880 = vadd.f32 %v830, %v864
        %881 = vst [vmem:[%s265] sm:$0xff] %v865
        %882 = vst [vmem:[%s265 + $0x8] sm:$0xff] %v866
        %883 = vst [vmem:[%s265 + $0x10] sm:$0xff] %v867
        %884 = vst [vmem:[%s265 + $0x18] sm:$0xff] %v868
        %885 = vst [vmem:[%s265 + $0x20] sm:$0xff] %v869
        %886 = vst [vmem:[%s265 + $0x28] sm:$0xff] %v870
        %887 = vst [vmem:[%s265 + $0x30] sm:$0xff] %v871
        %888 = vst [vmem:[%s265 + $0x38] sm:$0xff] %v872
        %889 = vst [vmem:[%s265 + $0x40] sm:$0xff] %v873
        %890 = vst [vmem:[%s265 + $0x48] sm:$0xff] %v874
        %891 = vst [vmem:[%s265 + $0x50] sm:$0xff] %v875
        %892 = vst [vmem:[%s265 + $0x58] sm:$0xff] %v876
        %893 = vst [vmem:[%s265 + $0x60] sm:$0xff] %v877
        %894 = vst [vmem:[%s265 + $0x68] sm:$0xff] %v878
        %895 = vst [vmem:[%s265 + $0x70] sm:$0xff] %v879
        %896 = vst [vmem:[%s265 + $0x78] sm:$0xff] %v880
        %v897 = vld [vmem:[%s265] sm:$0xff]
        %v898 = vld [vmem:[%s265 + $0x8] sm:$0xff]
        %v899 = vld [vmem:[%s265 + $0x10] sm:$0xff]
        %v900 = vld [vmem:[%s265 + $0x18] sm:$0xff]
        %v901 = vld [vmem:[%s265 + $0x20] sm:$0xff]
        %v902 = vld [vmem:[%s265 + $0x28] sm:$0xff]
        %v903 = vld [vmem:[%s265 + $0x30] sm:$0xff]
        %v904 = vld [vmem:[%s265 + $0x38] sm:$0xff]
        %v905 = vld [vmem:[%s265 + $0x40] sm:$0xff]
        %v906 = vld [vmem:[%s265 + $0x48] sm:$0xff]
        %v907 = vld [vmem:[%s265 + $0x50] sm:$0xff]
        %v908 = vld [vmem:[%s265 + $0x58] sm:$0xff]
        %v909 = vld [vmem:[%s265 + $0x60] sm:$0xff]
        %v910 = vld [vmem:[%s265 + $0x68] sm:$0xff]
        %v911 = vld [vmem:[%s265 + $0x70] sm:$0xff]
        %v912 = vld [vmem:[%s265 + $0x78] sm:$0xff]
        %s913 = scalar_lea.vmem [#allocation2], %s713
        %v914 = vld [vmem:[%s913] sm:$0xff]
        %v915 = vld [vmem:[%s913 + $0x8] sm:$0xff]
        %v916 = vld [vmem:[%s913 + $0x10] sm:$0xff]
        %v917 = vld [vmem:[%s913 + $0x18] sm:$0xff]
        %v918 = vld [vmem:[%s913 + $0x20] sm:$0xff]
        %v919 = vld [vmem:[%s913 + $0x28] sm:$0xff]
        %v920 = vld [vmem:[%s913 + $0x30] sm:$0xff]
        %v921 = vld [vmem:[%s913 + $0x38] sm:$0xff]
        %v922 = vld [vmem:[%s913 + $0x40] sm:$0xff]
        %v923 = vld [vmem:[%s913 + $0x48] sm:$0xff]
        %v924 = vld [vmem:[%s913 + $0x50] sm:$0xff]
        %v925 = vld [vmem:[%s913 + $0x58] sm:$0xff]
        %v926 = vld [vmem:[%s913 + $0x60] sm:$0xff]
        %v927 = vld [vmem:[%s913 + $0x68] sm:$0xff]
        %v928 = vld [vmem:[%s913 + $0x70] sm:$0xff]
        %v929 = vld [vmem:[%s913 + $0x78] sm:$0xff]
        %v930 = vstv %s753
        %v931 = vmul.f32 %v914, %v930
        %v932 = vmul.f32 %v915, %v930
        %v933 = vmul.f32 %v916, %v930
        %v934 = vmul.f32 %v917, %v930
        %v935 = vmul.f32 %v918, %v930
        %v936 = vmul.f32 %v919, %v930
        %v937 = vmul.f32 %v920, %v930
        %v938 = vmul.f32 %v921, %v930
        %v939 = vmul.f32 %v922, %v930
        %v940 = vmul.f32 %v923, %v930
        %v941 = vmul.f32 %v924, %v930
        %v942 = vmul.f32 %v925, %v930
        %v943 = vmul.f32 %v926, %v930
        %v944 = vmul.f32 %v927, %v930
        %v945 = vmul.f32 %v928, %v930
        %v946 = vmul.f32 %v929, %v930
        %v947 = vadd.f32 %v897, %v931
        %v948 = vadd.f32 %v898, %v932
        %v949 = vadd.f32 %v899, %v933
        %v950 = vadd.f32 %v900, %v934
        %v951 = vadd.f32 %v901, %v935
        %v952 = vadd.f32 %v902, %v936
        %v953 = vadd.f32 %v903, %v937
        %v954 = vadd.f32 %v904, %v938
        %v955 = vadd.f32 %v905, %v939
        %v956 = vadd.f32 %v906, %v940
        %v957 = vadd.f32 %v907, %v941
        %v958 = vadd.f32 %v908, %v942
        %v959 = vadd.f32 %v909, %v943
        %v960 = vadd.f32 %v910, %v944
        %v961 = vadd.f32 %v911, %v945
        %v962 = vadd.f32 %v912, %v946
        %963 = vst [vmem:[%s265] sm:$0xff] %v947
        %964 = vst [vmem:[%s265 + $0x8] sm:$0xff] %v948
        %965 = vst [vmem:[%s265 + $0x10] sm:$0xff] %v949
        %966 = vst [vmem:[%s265 + $0x18] sm:$0xff] %v950
        %967 = vst [vmem:[%s265 + $0x20] sm:$0xff] %v951
        %968 = vst [vmem:[%s265 + $0x28] sm:$0xff] %v952
        %969 = vst [vmem:[%s265 + $0x30] sm:$0xff] %v953
        %970 = vst [vmem:[%s265 + $0x38] sm:$0xff] %v954
        %971 = vst [vmem:[%s265 + $0x40] sm:$0xff] %v955
        %972 = vst [vmem:[%s265 + $0x48] sm:$0xff] %v956
        %973 = vst [vmem:[%s265 + $0x50] sm:$0xff] %v957
        %974 = vst [vmem:[%s265 + $0x58] sm:$0xff] %v958
        %975 = vst [vmem:[%s265 + $0x60] sm:$0xff] %v959
        %976 = vst [vmem:[%s265 + $0x68] sm:$0xff] %v960
        %977 = vst [vmem:[%s265 + $0x70] sm:$0xff] %v961
        %978 = vst [vmem:[%s265 + $0x78] sm:$0xff] %v962
        %v979 = vld [vmem:[%s265] sm:$0xff]
        %v980 = vld [vmem:[%s265 + $0x8] sm:$0xff]
        %v981 = vld [vmem:[%s265 + $0x10] sm:$0xff]
        %v982 = vld [vmem:[%s265 + $0x18] sm:$0xff]
        %v983 = vld [vmem:[%s265 + $0x20] sm:$0xff]
        %v984 = vld [vmem:[%s265 + $0x28] sm:$0xff]
        %v985 = vld [vmem:[%s265 + $0x30] sm:$0xff]
        %v986 = vld [vmem:[%s265 + $0x38] sm:$0xff]
        %v987 = vld [vmem:[%s265 + $0x40] sm:$0xff]
        %v988 = vld [vmem:[%s265 + $0x48] sm:$0xff]
        %v989 = vld [vmem:[%s265 + $0x50] sm:$0xff]
        %v990 = vld [vmem:[%s265 + $0x58] sm:$0xff]
        %v991 = vld [vmem:[%s265 + $0x60] sm:$0xff]
        %v992 = vld [vmem:[%s265 + $0x68] sm:$0xff]
        %v993 = vld [vmem:[%s265 + $0x70] sm:$0xff]
        %v994 = vld [vmem:[%s265 + $0x78] sm:$0xff]
        %s995 = scalar_lea.vmem [#allocation2], %s738
        %v996 = vld [vmem:[%s995] sm:$0xff]
        %v997 = vld [vmem:[%s995 + $0x8] sm:$0xff]
        %v998 = vld [vmem:[%s995 + $0x10] sm:$0xff]
        %v999 = vld [vmem:[%s995 + $0x18] sm:$0xff]
        %v1000 = vld [vmem:[%s995 + $0x20] sm:$0xff]
        %v1001 = vld [vmem:[%s995 + $0x28] sm:$0xff]
        %v1002 = vld [vmem:[%s995 + $0x30] sm:$0xff]
        %v1003 = vld [vmem:[%s995 + $0x38] sm:$0xff]
        %v1004 = vld [vmem:[%s995 + $0x40] sm:$0xff]
        %v1005 = vld [vmem:[%s995 + $0x48] sm:$0xff]
        %v1006 = vld [vmem:[%s995 + $0x50] sm:$0xff]
        %v1007 = vld [vmem:[%s995 + $0x58] sm:$0xff]
        %v1008 = vld [vmem:[%s995 + $0x60] sm:$0xff]
        %v1009 = vld [vmem:[%s995 + $0x68] sm:$0xff]
        %v1010 = vld [vmem:[%s995 + $0x70] sm:$0xff]
        %v1011 = vld [vmem:[%s995 + $0x78] sm:$0xff]
        %v1012 = vstv %s758
        %v1013 = vmul.f32 %v996, %v1012
        %v1014 = vmul.f32 %v997, %v1012
        %v1015 = vmul.f32 %v998, %v1012
        %v1016 = vmul.f32 %v999, %v1012
        %v1017 = vmul.f32 %v1000, %v1012
        %v1018 = vmul.f32 %v1001, %v1012
        %v1019 = vmul.f32 %v1002, %v1012
        %v1020 = vmul.f32 %v1003, %v1012
        %v1021 = vmul.f32 %v1004, %v1012
        %v1022 = vmul.f32 %v1005, %v1012
        %v1023 = vmul.f32 %v1006, %v1012
        %v1024 = vmul.f32 %v1007, %v1012
        %v1025 = vmul.f32 %v1008, %v1012
        %v1026 = vmul.f32 %v1009, %v1012
        %v1027 = vmul.f32 %v1010, %v1012
        %v1028 = vmul.f32 %v1011, %v1012
        %v1029 = vadd.f32 %v979, %v1013
        %v1030 = vadd.f32 %v980, %v1014
        %v1031 = vadd.f32 %v981, %v1015
        %v1032 = vadd.f32 %v982, %v1016
        %v1033 = vadd.f32 %v983, %v1017
        %v1034 = vadd.f32 %v984, %v1018
        %v1035 = vadd.f32 %v985, %v1019
        %v1036 = vadd.f32 %v986, %v1020
        %v1037 = vadd.f32 %v987, %v1021
        %v1038 = vadd.f32 %v988, %v1022
        %v1039 = vadd.f32 %v989, %v1023
        %v1040 = vadd.f32 %v990, %v1024
        %v1041 = vadd.f32 %v991, %v1025
        %v1042 = vadd.f32 %v992, %v1026
        %v1043 = vadd.f32 %v993, %v1027
        %v1044 = vadd.f32 %v994, %v1028
        %1045 = vst [vmem:[%s265] sm:$0xff] %v1029
        %1046 = vst [vmem:[%s265 + $0x8] sm:$0xff] %v1030
        %1047 = vst [vmem:[%s265 + $0x10] sm:$0xff] %v1031
        %1048 = vst [vmem:[%s265 + $0x18] sm:$0xff] %v1032
        %1049 = vst [vmem:[%s265 + $0x20] sm:$0xff] %v1033
        %1050 = vst [vmem:[%s265 + $0x28] sm:$0xff] %v1034
        %1051 = vst [vmem:[%s265 + $0x30] sm:$0xff] %v1035
        %1052 = vst [vmem:[%s265 + $0x38] sm:$0xff] %v1036
        %1053 = vst [vmem:[%s265 + $0x40] sm:$0xff] %v1037
        %1054 = vst [vmem:[%s265 + $0x48] sm:$0xff] %v1038
        %1055 = vst [vmem:[%s265 + $0x50] sm:$0xff] %v1039
        %1056 = vst [vmem:[%s265 + $0x58] sm:$0xff] %v1040
        %1057 = vst [vmem:[%s265 + $0x60] sm:$0xff] %v1041
        %1058 = vst [vmem:[%s265 + $0x68] sm:$0xff] %v1042
        %1059 = vst [vmem:[%s265 + $0x70] sm:$0xff] %v1043
        %1060 = vst [vmem:[%s265 + $0x78] sm:$0xff] %v1044
        %v1061 = vld [vmem:[%s265] sm:$0xff]
        %v1062 = vld [vmem:[%s265 + $0x8] sm:$0xff]
        %v1063 = vld [vmem:[%s265 + $0x10] sm:$0xff]
        %v1064 = vld [vmem:[%s265 + $0x18] sm:$0xff]
        %v1065 = vld [vmem:[%s265 + $0x20] sm:$0xff]
        %v1066 = vld [vmem:[%s265 + $0x28] sm:$0xff]
        %v1067 = vld [vmem:[%s265 + $0x30] sm:$0xff]
        %v1068 = vld [vmem:[%s265 + $0x38] sm:$0xff]
        %v1069 = vld [vmem:[%s265 + $0x40] sm:$0xff]
        %v1070 = vld [vmem:[%s265 + $0x48] sm:$0xff]
        %v1071 = vld [vmem:[%s265 + $0x50] sm:$0xff]
        %v1072 = vld [vmem:[%s265 + $0x58] sm:$0xff]
        %v1073 = vld [vmem:[%s265 + $0x60] sm:$0xff]
        %v1074 = vld [vmem:[%s265 + $0x68] sm:$0xff]
        %v1075 = vld [vmem:[%s265 + $0x70] sm:$0xff]
        %v1076 = vld [vmem:[%s265 + $0x78] sm:$0xff]
        %v1077 = vstv %s764
        %v1078 = vmul.f32 %v1061, %v1077
        %v1079 = vmul.f32 %v1062, %v1077
        %v1080 = vmul.f32 %v1063, %v1077
        %v1081 = vmul.f32 %v1064, %v1077
        %v1082 = vmul.f32 %v1065, %v1077
        %v1083 = vmul.f32 %v1066, %v1077
        %v1084 = vmul.f32 %v1067, %v1077
        %v1085 = vmul.f32 %v1068, %v1077
        %v1086 = vmul.f32 %v1069, %v1077
        %v1087 = vmul.f32 %v1070, %v1077
        %v1088 = vmul.f32 %v1071, %v1077
        %v1089 = vmul.f32 %v1072, %v1077
        %v1090 = vmul.f32 %v1073, %v1077
        %v1091 = vmul.f32 %v1074, %v1077
        %v1092 = vmul.f32 %v1075, %v1077
        %v1093 = vmul.f32 %v1076, %v1077
        %1094 = vst [vmem:[%s265] sm:$0xff] %v1078
        %1095 = vst [vmem:[%s265 + $0x8] sm:$0xff] %v1079
        %1096 = vst [vmem:[%s265 + $0x10] sm:$0xff] %v1080
        %1097 = vst [vmem:[%s265 + $0x18] sm:$0xff] %v1081
        %1098 = vst [vmem:[%s265 + $0x20] sm:$0xff] %v1082
        %1099 = vst [vmem:[%s265 + $0x28] sm:$0xff] %v1083
        %1100 = vst [vmem:[%s265 + $0x30] sm:$0xff] %v1084
        %1101 = vst [vmem:[%s265 + $0x38] sm:$0xff] %v1085
        %1102 = vst [vmem:[%s265 + $0x40] sm:$0xff] %v1086
        %1103 = vst [vmem:[%s265 + $0x48] sm:$0xff] %v1087
        %1104 = vst [vmem:[%s265 + $0x50] sm:$0xff] %v1088
        %1105 = vst [vmem:[%s265 + $0x58] sm:$0xff] %v1089
        %1106 = vst [vmem:[%s265 + $0x60] sm:$0xff] %v1090
        %1107 = vst [vmem:[%s265 + $0x68] sm:$0xff] %v1091
        %1108 = vst [vmem:[%s265 + $0x70] sm:$0xff] %v1092
        %1109 = vst [vmem:[%s265 + $0x78] sm:$0xff] %v1093
        %s1110 = sand.u32 %s109, 1
        %s1111 = scalar_lea.sflag [#allocation5], %s1110
        %s1112 = sand.u32 %s109, 1
        %s1113 = smul.addr %s1112, 128
        %s1114 = scalar_lea.vmem [#allocation9], %s1113
        // Predicated region
        $region52: #{tpu_custom_call.1} parent=31 // pred_check
          %p1115 = pneg %p119
        $region53: #{tpu_custom_call.1} parent=31 // pred_check_branch
          %1117 = sbr.rel (%p1115) target = $region55
        $region54: #{tpu_custom_call.1} parent=31 // pred_region
          %s1119 = ssub.s32 2048, 2048
          %1120 = vsyncadd %s1111, %s1119
          %s1121 = smul.addr %s23, 16
          %s1122 = smul.addr %s1121, 128
          %s1123 = scalar_lea.hbm %s3, %s1122
          %s1124 = sshll.u32 %s1114, 4
          %s1125 = int_to_ptr.vmem [resolvable:$true] %s1124
          %1130 = dma.vmem_to_hbm [thread:$0]  %s1125, 2048, %s1123, %s1111, 128, 128, 8
        $region55: #{tpu_custom_call.1} parent=31 // pred_fallthru
          _
      $region32: #{tpu_custom_call.1} parent=5 // pred_fallthru
        _
      %p1131 = scmp.le.s32.totalorder 2, %s18
      // Predicated region
      $region56: #{tpu_custom_call.1} parent=5 // pred_check
        %p1132 = pneg %p1131
      $region57: #{tpu_custom_call.1} parent=5 // pred_check_branch
        %1134 = sbr.rel (%p1132) target = $region59
      $region58: #{tpu_custom_call.1} parent=5 // pred_region
        %s1135 = ssub.s32 %s18, 2
        // Predicated region
        $region60: #{tpu_custom_call.1} parent=58 // pred_check
          %p1136 = pneg %p125
        $region61: #{tpu_custom_call.1} parent=58 // pred_check_branch
          %1138 = sbr.rel (%p1136) target = $region63
        $region62: #{tpu_custom_call.1} parent=58 // pred_region
          %s1139 = sand.u32 %s110, 1
          %s1140 = scalar_lea.sflag [#allocation5], %s1139
          %s1141 = sand.u32 %s110, 1
          %s1142 = smul.addr %s1141, 128
          %s1143 = scalar_lea.vmem [#allocation9], %s1142
          %1144 = dma.done %s1140, 2048
        $region63: #{tpu_custom_call.1} parent=58 // pred_fallthru
          _
      $region59: #{tpu_custom_call.1} parent=5 // pred_fallthru
        _
    $region6: #{tpu_custom_call.1} parent=1 // loop_footer
      %s22 = sadd.s32 1, %s18
    $region7: #{tpu_custom_call.1} parent=1 // loop_footer_branch
      %17 = sbr.rel target = $region3
    $region8: #{tpu_custom_call.1} parent=1 // loop_exit
      _
    %1145 = vsyncpa [#allocation4], 1
    %s1146 = scalar_lea.sflag [#allocation4], 1
    %1147 = vsyncpa %s1146, 1
    %1148 = vsyncpa [#allocation7], 1
    %s1149 = scalar_lea.sflag [#allocation7], 1
    %1150 = vsyncpa %s1149, 1
    %1151 = vsyncpa [#allocation5], 1
    %s1152 = scalar_lea.sflag [#allocation5], 1
    %1153 = vsyncpa %s1152, 1

</llo_original>
